<compile_context>
chip_gen: v7x
topology: tpu7x:2x2x1
jax: 0.10.0
libtpu: 0.0.40
codegen_flags: <defaults>
</compile_context>

<pallas_src>
import numpy as np

import jax
import jax.numpy as jnp
from jax import lax
from jax.experimental import pallas as pl
from jax.experimental.pallas import tpu as pltpu


def _gram_kernel(bi_ref, bj_ref, a_ref, b_ref, o_ref, acc_ref):
    """One (i, j) output block, reduced over the K grid axis.

    a_ref: (t, tk) rows of X for block i;  b_ref: (t, tk) rows of X for block j.
    Contract both on their last axis -> A @ B.T without any wrapper transpose.
    Accumulate in an f32 VMEM scratch; cast to the output dtype on the last K step.
    """
    k = pl.program_id(1)

    @pl.when(k == 0)
    def _init():
        acc_ref[...] = jnp.zeros_like(acc_ref)

    acc_ref[...] += lax.dot_general(
        a_ref[...], b_ref[...],
        dimension_numbers=(((1,), (1,)), ((), ())),
        preferred_element_type=jnp.float32,
    )

    @pl.when(k == pl.num_programs(1) - 1)
    def _finalize():
        o_ref[...] = acc_ref[...].astype(o_ref.dtype)


def _round_up(v: int, m: int) -> int:
    return (v + m - 1) // m * m


def _pick_tile(n128: int, desired: int) -> int:
    """Largest 128-multiple tile <= desired with <= 12.5% row padding."""
    for cand in sorted({desired, 1024, 512, 384, 256, 128}, reverse=True):
        if cand > desired:
            continue
        c = max(128, (min(cand, n128) // 128) * 128)
        if _round_up(n128, c) * 8 <= n128 * 9:
            return c
    return 128


def linear_kernel_forward(x: jax.Array, *, tile: int | None = None,
                          tk_max: int = 1024,
                          use_bf16_inputs: bool = True,
                          symmetric: bool = True) -> jax.Array:
    """Compute X @ X.T with a Pallas TPU kernel. X must be 2-D [N, D].

    Fast path (default): bf16 MXU operands with f32 accumulation. This changes
    numerics vs. a strict f32-operand matmul; pass use_bf16_inputs=False when
    full f32 operand precision is required.
    """
    assert x.ndim == 2, "linear_kernel expects a 2-D matrix"
    assert jnp.issubdtype(x.dtype, jnp.floating), "expects a floating dtype"

    N, D = x.shape
    out_dtype = x.dtype
    in_dtype = jnp.bfloat16 if use_bf16_inputs else x.dtype

    # ---------------- tile selection ----------------
    n128 = _round_up(max(N, 1), 128)
    d128 = _round_up(max(D, 1), 128)

    desired = tile if tile is not None else (1024 if n128 >= 4096 else 512)
    t = _pick_tile(n128, max(128, _round_up(desired, 128)))
    np_ = _round_up(N, t)
    nb = np_ // t

    if d128 <= tk_max:
        tk, dp = d128, d128          # whole reduction in one K tile
    else:
        tk, dp = tk_max, _round_up(D, tk_max)
    kt = dp // tk

    # -------- single fused pad + cast pass over X (no transpose pass) --------
    xp = x.astype(in_dtype)
    if (np_, dp) != (N, D):
        # Zero padding does not change X @ X.T (extra rows/cols sliced off below).
        xp = jnp.pad(xp, ((0, np_ - N), (0, dp - D)))

    # ---------------- block enumeration (triangular or dense) ----------------
    if symmetric:
        ii, jj = np.triu_indices(nb)                     # only j >= i blocks
    else:
        ii, jj = np.meshgrid(np.arange(nb), np.arange(nb), indexing="ij")
        ii, jj = ii.ravel(), jj.ravel()
    bi = jnp.asarray(ii, dtype=jnp.int32)
    bj = jnp.asarray(jj, dtype=jnp.int32)
    n_steps = int(bi.shape[0])

    # ---------------- compiler params / cost ----------------
    in_bytes = jnp.dtype(in_dtype).itemsize
    out_bytes = jnp.dtype(out_dtype).itemsize
    vmem_est = (2 * 2 * t * tk * in_bytes          # double-buffered LHS + RHS
                + 2 * t * t * out_bytes            # double-buffered out block
                + t * t * 4)                       # f32 accumulator scratch
    vmem_limit = int(min(48 * 1024 * 1024, max(32 * 1024 * 1024, vmem_est * 2)))

    cost = pl.CostEstimate(
        flops=2 * n_steps * t * t * dp,
        transcendentals=0,
        bytes_accessed=(2 * n_steps * t * dp * in_bytes      # LHS + RHS re-reads
                        + n_steps * t * t * out_bytes),      # output writeback
    )

    # ---------------- pallas call ----------------
    y = pl.pallas_call(
        _gram_kernel,
        out_shape=jax.ShapeDtypeStruct((np_, np_), out_dtype),
        grid_spec=pltpu.PrefetchScalarGridSpec(
            num_scalar_prefetch=2,
            grid=(n_steps, kt),
            in_specs=[
                pl.BlockSpec((t, tk), lambda s, k, bi_r, bj_r: (bi_r[s], k)),
                pl.BlockSpec((t, tk), lambda s, k, bi_r, bj_r: (bj_r[s], k)),
            ],
            out_specs=pl.BlockSpec((t, t), lambda s, k, bi_r, bj_r: (bi_r[s], bj_r[s])),
            scratch_shapes=[pltpu.VMEM((t, t), jnp.float32)],
        ),
        compiler_params=pltpu.CompilerParams(
            dimension_semantics=("parallel", "arbitrary"),
            vmem_limit_bytes=vmem_limit,
        ),
        cost_estimate=cost,
    )(bi, bj, xp, xp)

    # ---------------- mirror the lower triangle (cheap N^2 pass) ----------------
    if symmetric and nb > 1:
        blk = jnp.arange(np_, dtype=jnp.int32) // t
        computed = blk[None, :] >= blk[:, None]        # upper-triangular blocks
        y = jnp.where(computed, y, y.T)

    if (np_, np_) != (N, N):
        y = y[:N, :N]
    return y


if __name__ == "__main__":
    key = jax.random.PRNGKey(0)

    # Small shape consistent with the module's forward: 2-D X, Y = X @ X.T.
    N, D = 256, 384
    x = jax.random.normal(key, (N, D), dtype=jnp.float32)
    y_ref = x @ x.T

    # 1) default fast path: bf16 MXU operands, f32 accumulation.
    y = jax.block_until_ready(linear_kernel_forward(x))
    assert y.shape == (N, N) and y.dtype == x.dtype
    assert jnp.allclose(y, y_ref, atol=0.5, rtol=2e-2), "mismatch (bf16 fast path)"

    # 2) full-precision operand path.
    y32 = jax.block_until_ready(linear_kernel_forward(x, use_bf16_inputs=False))
    assert jnp.allclose(y32, y_ref, atol=5e-2, rtol=1e-3), "mismatch (f32 path)"

    # 3) multi-K reduction + triangular multi-block + non-aligned shapes.
    N2, D2 = 200, 2304
    x2 = jax.random.normal(jax.random.PRNGKey(1), (N2, D2), dtype=jnp.float32)
    y2 = jax.block_until_ready(linear_kernel_forward(x2, tile=128, tk_max=1024))
    assert y2.shape == (N2, N2)
    assert jnp.allclose(y2, x2 @ x2.T, atol=2.0, rtol=2e-2), \
        "mismatch vs reference (triangular multi-K path)"

    print("KERNEL_OK")
</pallas_src>

<mosaic_0001>
module attributes {stable_mosaic.version = 11 : i64} {
  func.func @_gram_kernel(%arg0: i32, %arg1: i32, %arg2: memref<1xi32, #tpu.memory_space<smem>>, %arg3: memref<1xi32, #tpu.memory_space<smem>>, %arg4: memref<256x384xbf16, #tpu.memory_space<vmem>>, %arg5: memref<256x384xbf16, #tpu.memory_space<vmem>>, %arg6: memref<256x256xf32, #tpu.memory_space<vmem>>, %arg7: memref<256x256xf32, #tpu.memory_space<vmem>>) attributes {dimension_semantics = [#tpu.dimension_semantics<parallel>, #tpu.dimension_semantics<arbitrary>], iteration_bounds = array<i64: 1, 1>, scalar_prefetch = 2 : i64, scratch_operands = 1 : i64, tpu.core_type = #tpu.core_type<tc>, window_params = [{transform_indices = @transform_0, window_bounds = array<i64: 256, 384>}, {transform_indices = @transform_1, window_bounds = array<i64: 256, 384>}, {transform_indices = @transform_2, window_bounds = array<i64: 256, 256>}]} {
    %c0_i32 = arith.constant 0 : i32
    %0 = arith.cmpi eq, %arg1, %c0_i32 : i32
    %1 = arith.extui %0 : i1 to i32
    %c0_i32_0 = arith.constant 0 : i32
    %2 = arith.cmpi ne, %1, %c0_i32_0 : i32
    scf.if %2 {
      %cst_10 = arith.constant 0.000000e+00 : f32
      %12 = vector.broadcast %cst_10 : f32 to vector<256x256xf32>
      %c0_11 = arith.constant 0 : index
      %c0_12 = arith.constant 0 : index
      %13 = vector.load %arg7[%c0_11, %c0_12] : memref<256x256xf32, #tpu.memory_space<vmem>>, vector<256x256xf32>
      tpu.vector_store %arg7[%c0_11, %c0_12], %12 {strides = array<i32>} : memref<256x256xf32, #tpu.memory_space<vmem>>, vector<256x256xf32>,
    } else {
    }
    %c0 = arith.constant 0 : index
    %c0_1 = arith.constant 0 : index
    %3 = vector.load %arg7[%c0, %c0_1] : memref<256x256xf32, #tpu.memory_space<vmem>>, vector<256x256xf32>
    %c0_2 = arith.constant 0 : index
    %c0_3 = arith.constant 0 : index
    %4 = vector.load %arg4[%c0_2, %c0_3] : memref<256x384xbf16, #tpu.memory_space<vmem>>, vector<256x384xbf16>
    %c0_4 = arith.constant 0 : index
    %c0_5 = arith.constant 0 : index
    %5 = vector.load %arg5[%c0_4, %c0_5] : memref<256x384xbf16, #tpu.memory_space<vmem>>, vector<256x384xbf16>
    %cst = arith.constant dense<0.000000e+00> : vector<256x256xf32>
    %6 = tpu.matmul %4, %5, %cst {dimension_numbers = #tpu.dot_dimension_numbers<[1], [1], [0], [0], [0, 0, 1, 0], [], []>} : vector<256x384xbf16>, vector<256x384xbf16>, vector<256x256xf32> -> vector<256x256xf32>
    %7 = arith.addf %3, %6 : vector<256x256xf32>
    %c0_6 = arith.constant 0 : index
    %c0_7 = arith.constant 0 : index
    %8 = vector.load %arg7[%c0_6, %c0_7] : memref<256x256xf32, #tpu.memory_space<vmem>>, vector<256x256xf32>
    tpu.vector_store %arg7[%c0_6, %c0_7], %7 {strides = array<i32>} : memref<256x256xf32, #tpu.memory_space<vmem>>, vector<256x256xf32>,
    %c0_i32_8 = arith.constant 0 : i32
    %9 = arith.cmpi eq, %arg1, %c0_i32_8 : i32
    %10 = arith.extui %9 : i1 to i32
    %c0_i32_9 = arith.constant 0 : i32
    %11 = arith.cmpi ne, %10, %c0_i32_9 : i32
    scf.if %11 {
      %c0_10 = arith.constant 0 : index
      %c0_11 = arith.constant 0 : index
      %12 = vector.load %arg7[%c0_10, %c0_11] : memref<256x256xf32, #tpu.memory_space<vmem>>, vector<256x256xf32>
      %c0_12 = arith.constant 0 : index
      %c0_13 = arith.constant 0 : index
      %13 = vector.load %arg6[%c0_12, %c0_13] : memref<256x256xf32, #tpu.memory_space<vmem>>, vector<256x256xf32>
      tpu.vector_store %arg6[%c0_12, %c0_13], %12 {strides = array<i32>} : memref<256x256xf32, #tpu.memory_space<vmem>>, vector<256x256xf32>,
    } else {
    }
    return
  }
  func.func @transform_0(%arg0: i32, %arg1: i32, %arg2: memref<1xi32, #tpu.memory_space<smem>>, %arg3: memref<1xi32, #tpu.memory_space<smem>>) -> (i32, i32) {
    %0 = arith.index_cast %arg0 : i32 to index
    %1 = memref.load %arg2[%0] : memref<1xi32, #tpu.memory_space<smem>>
    %c0_i32 = arith.constant 0 : i32
    return %1, %arg1 : i32, i32
  }
  func.func @transform_1(%arg0: i32, %arg1: i32, %arg2: memref<1xi32, #tpu.memory_space<smem>>, %arg3: memref<1xi32, #tpu.memory_space<smem>>) -> (i32, i32) {
    %0 = arith.index_cast %arg0 : i32 to index
    %1 = memref.load %arg3[%0] : memref<1xi32, #tpu.memory_space<smem>>
    %c0_i32 = arith.constant 0 : i32
    return %1, %arg1 : i32, i32
  }
  func.func @transform_2(%arg0: i32, %arg1: i32, %arg2: memref<1xi32, #tpu.memory_space<smem>>, %arg3: memref<1xi32, #tpu.memory_space<smem>>) -> (i32, i32) {
    %0 = arith.index_cast %arg0 : i32 to index
    %1 = memref.load %arg2[%0] : memref<1xi32, #tpu.memory_space<smem>>
    %2 = arith.index_cast %arg0 : i32 to index
    %3 = memref.load %arg3[%2] : memref<1xi32, #tpu.memory_space<smem>>
    %c0_i32 = arith.constant 0 : i32
    return %1, %3 : i32, i32
  }
}

</mosaic_0001>

<llo_original>
// kernel: tpu_custom_call.1
$region0: #{tpu_custom_call.1}
  #allocation0 [shape = 'u32[]', space=smem, size = 0x4, offset = 0x4, fixed_abs, tag = 'smem constant byte address 0x4 - core index']
  #allocation1 [shape = 'u32[144,128]{1,0:T(1,128)}', space=vmem, size = 0x12000, scoped, tag = 'internal scratch']
  #allocation2 [shape = 'f32[256,256]{1,0:T(8,128)}', space=vmem, size = 0x40000, scoped, tag = 'scratch operand']
  #allocation3 [shape = 's32[1]{0}', space=sflag, size = 0x4, scoped, tag = 'scoped memory for tpu_custom_call.1']
  #allocation4 [shape = 's32[1]{0:T(128)S(6)}', space=smem, size = 0x200, scoped, tag = 'prefetched SMEM operand 0']
  #allocation5 [shape = 's32[1]{0:T(128)S(6)}', space=smem, size = 0x200, scoped, tag = 'prefetched SMEM operand 1']
  %s0 = inlined_call_operand.<no memory space> [shape: s32[1], index: 0, kind: input, shape index: {}]
  %s1 = inlined_call_operand.<no memory space> [shape: s32[1], index: 1, kind: input, shape index: {}]
  %s2 = inlined_call_operand.hbm [shape: bf16[256,384], index: 2, kind: input, shape index: {}]
  %s3 = inlined_call_operand.hbm [shape: bf16[256,384], index: 3, kind: input, shape index: {}]
  %s4 = inlined_call_operand.hbm [shape: f32[256,256], index: 4, kind: output, shape index: {}]
  %s5 = sld [smem:[#allocation0]]
  $region34: #{tpu_custom_call.1} parent=0
    _
  %s7 = ssub.s32 1, %s5
  %s8 = scalar_select 0, %s7, %s5
  %9 = sst [smem:[#allocation4]] %s0
  %10 = sst [smem:[#allocation5]] %s1
  $region1: #{tpu_custom_call.1} parent=0
    #allocation6 [shape = 'u8[196608]{0}', space=vmem, size = 0x30000, scoped, tag = 'input window, operand 2, single buffered']
    #allocation7 [shape = 's32[1]{0}', space=sflag, size = 0x4, scoped, tag = 'scoped memory for tpu_custom_call.1']
    #allocation8 [shape = 's32[1]{0}', space=sflag, size = 0x4, scoped, tag = 'scoped memory for tpu_custom_call.1']
    #allocation9 [shape = 'u8[196608]{0}', space=vmem, size = 0x30000, scoped, tag = 'input window, operand 3, single buffered']
    #allocation10 [shape = 's32[1]{0}', space=sflag, size = 0x4, scoped, tag = 'scoped memory for tpu_custom_call.1']
    #allocation11 [shape = 'u8[262144]{0}', space=vmem, size = 0x40000, scoped, tag = 'output window, operand 0, single buffered']
    %11 = vsyncpa [#allocation7], 0
    %12 = vsyncpa [#allocation10], 0
    %13 = vsyncpa [#allocation8], 0
    // Predicated region
    $region2: #{tpu_custom_call.1} parent=1 // pred_check
      _
    $region3: #{tpu_custom_call.1} parent=1 // pred_check_branch
      %15 = sbr.rel (0) target = $region5
    $region4: #{tpu_custom_call.1} parent=1 // pred_region
      %s16 = sld [smem:[#allocation4]]
      %s17 = smul.u32 32, %s16
      %s19 = ssub.s32 6144, 6144
      %20 = vsyncadd [#allocation7], %s19
      %s21 = smul.addr %s17, 3
      %s22 = smul.addr %s21, 64
      %s23 = scalar_lea.hbm %s2, %s22
      %s24 = sshll.u32 [#allocation6], 4
      %s25 = int_to_ptr.vmem [resolvable:$true] %s24
      %30 = dma.hbm_to_vmem [thread:$0]  %s23, 6144, %s25, [#allocation7], 192, 192, 12
    $region5: #{tpu_custom_call.1} parent=1 // pred_fallthru
      _
    // Predicated region
    $region6: #{tpu_custom_call.1} parent=1 // pred_check
      _
    $region7: #{tpu_custom_call.1} parent=1 // pred_check_branch
      %32 = sbr.rel (0) target = $region9
    $region8: #{tpu_custom_call.1} parent=1 // pred_region
      %s33 = sld [smem:[#allocation5]]
      %s34 = smul.u32 32, %s33
      %s36 = ssub.s32 6144, 6144
      %37 = vsyncadd [#allocation10], %s36
      %s38 = smul.addr %s34, 3
      %s39 = smul.addr %s38, 64
      %s40 = scalar_lea.hbm %s3, %s39
      %s41 = sshll.u32 [#allocation9], 4
      %s42 = int_to_ptr.vmem [resolvable:$true] %s41
      %47 = dma.hbm_to_vmem [thread:$0]  %s40, 6144, %s42, [#allocation10], 192, 192, 12
    $region9: #{tpu_custom_call.1} parent=1 // pred_fallthru
      _
    // Predicated region
    $region10: #{tpu_custom_call.1} parent=1 // pred_check
      _
    $region11: #{tpu_custom_call.1} parent=1 // pred_check_branch
      %49 = sbr.rel (0) target = $region13
    $region12: #{tpu_custom_call.1} parent=1 // pred_region
      %50 = dma.done [#allocation7], 6144
    $region13: #{tpu_custom_call.1} parent=1 // pred_fallthru
      _
    // Predicated region
    $region14: #{tpu_custom_call.1} parent=1 // pred_check
      _
    $region15: #{tpu_custom_call.1} parent=1 // pred_check_branch
      %52 = sbr.rel (0) target = $region17
    $region16: #{tpu_custom_call.1} parent=1 // pred_region
      %53 = dma.done [#allocation10], 6144
    $region17: #{tpu_custom_call.1} parent=1 // pred_fallthru
      _
    %s54 = sld [smem:[#allocation4]]
    %s55 = smul.u32 32, %s54
    %s56 = sld [smem:[#allocation5]]
    %s57 = smul.u32 32, %s56
    %s58 = sld [smem:[#allocation4]]
    %s59 = sld [smem:[#allocation5]]
    %s60 = smul.u32 32, %s58
    %s61 = smul.u32 2, %s59
    %p63 = scmp.eq.s32.totalorder 0, 0
    // Predicated region
    $region18: #{tpu_custom_call.1} parent=1 // pred_check
      %p64 = pneg %p63
    $region19: #{tpu_custom_call.1} parent=1 // pred_check_branch
      %66 = sbr.rel (%p64) target = $region21
    $region20: #{tpu_custom_call.1} parent=1 // pred_region
      %67 = vst [vmem:[#allocation2] sm:$0xff] 0.0
      %68 = vst [vmem:[#allocation2 + $0x8] sm:$0xff] 0.0
      %69 = vst [vmem:[#allocation2 + $0x10] sm:$0xff] 0.0
      %70 = vst [vmem:[#allocation2 + $0x18] sm:$0xff] 0.0
      %71 = vst [vmem:[#allocation2 + $0x20] sm:$0xff] 0.0
      %72 = vst [vmem:[#allocation2 + $0x28] sm:$0xff] 0.0
      %73 = vst [vmem:[#allocation2 + $0x30] sm:$0xff] 0.0
      %74 = vst [vmem:[#allocation2 + $0x38] sm:$0xff] 0.0
      %75 = vst [vmem:[#allocation2 + $0x40] sm:$0xff] 0.0
      %76 = vst [vmem:[#allocation2 + $0x48] sm:$0xff] 0.0
      %77 = vst [vmem:[#allocation2 + $0x50] sm:$0xff] 0.0
      %78 = vst [vmem:[#allocation2 + $0x58] sm:$0xff] 0.0
      %79 = vst [vmem:[#allocation2 + $0x60] sm:$0xff] 0.0
      %80 = vst [vmem:[#allocation2 + $0x68] sm:$0xff] 0.0
      %81 = vst [vmem:[#allocation2 + $0x70] sm:$0xff] 0.0
      %82 = vst [vmem:[#allocation2 + $0x78] sm:$0xff] 0.0
      %83 = vst [vmem:[#allocation2 + $0x80] sm:$0xff] 0.0
      %84 = vst [vmem:[#allocation2 + $0x88] sm:$0xff] 0.0
      %85 = vst [vmem:[#allocation2 + $0x90] sm:$0xff] 0.0
      %86 = vst [vmem:[#allocation2 + $0x98] sm:$0xff] 0.0
      %87 = vst [vmem:[#allocation2 + $0xa0] sm:$0xff] 0.0
      %88 = vst [vmem:[#allocation2 + $0xa8] sm:$0xff] 0.0
      %89 = vst [vmem:[#allocation2 + $0xb0] sm:$0xff] 0.0
      %90 = vst [vmem:[#allocation2 + $0xb8] sm:$0xff] 0.0
      %91 = vst [vmem:[#allocation2 + $0xc0] sm:$0xff] 0.0
      %92 = vst [vmem:[#allocation2 + $0xc8] sm:$0xff] 0.0
      %93 = vst [vmem:[#allocation2 + $0xd0] sm:$0xff] 0.0
      %94 = vst [vmem:[#allocation2 + $0xd8] sm:$0xff] 0.0
      %95 = vst [vmem:[#allocation2 + $0xe0] sm:$0xff] 0.0
      %96 = vst [vmem:[#allocation2 + $0xe8] sm:$0xff] 0.0
      %97 = vst [vmem:[#allocation2 + $0xf0] sm:$0xff] 0.0
      %98 = vst [vmem:[#allocation2 + $0xf8] sm:$0xff] 0.0
      %99 = vst [vmem:[#allocation2 + $0x100] sm:$0xff] 0.0
      %100 = vst [vmem:[#allocation2 + $0x108] sm:$0xff] 0.0
      %101 = vst [vmem:[#allocation2 + $0x110] sm:$0xff] 0.0
      %102 = vst [vmem:[#allocation2 + $0x118] sm:$0xff] 0.0
      %103 = vst [vmem:[#allocation2 + $0x120] sm:$0xff] 0.0
      %104 = vst [vmem:[#allocation2 + $0x128] sm:$0xff] 0.0
      %105 = vst [vmem:[#allocation2 + $0x130] sm:$0xff] 0.0
      %106 = vst [vmem:[#allocation2 + $0x138] sm:$0xff] 0.0
      %107 = vst [vmem:[#allocation2 + $0x140] sm:$0xff] 0.0
      %108 = vst [vmem:[#allocation2 + $0x148] sm:$0xff] 0.0
      %109 = vst [vmem:[#allocation2 + $0x150] sm:$0xff] 0.0
      %110 = vst [vmem:[#allocation2 + $0x158] sm:$0xff] 0.0
      %111 = vst [vmem:[#allocation2 + $0x160] sm:$0xff] 0.0
      %112 = vst [vmem:[#allocation2 + $0x168] sm:$0xff] 0.0
      %113 = vst [vmem:[#allocation2 + $0x170] sm:$0xff] 0.0
      %114 = vst [vmem:[#allocation2 + $0x178] sm:$0xff] 0.0
      %115 = vst [vmem:[#allocation2 + $0x180] sm:$0xff] 0.0
      %116 = vst [vmem:[#allocation2 + $0x188] sm:$0xff] 0.0
      %117 = vst [vmem:[#allocation2 + $0x190] sm:$0xff] 0.0
      %118 = vst [vmem:[#allocation2 + $0x198] sm:$0xff] 0.0
      %119 = vst [vmem:[#allocation2 + $0x1a0] sm:$0xff] 0.0
      %120 = vst [vmem:[#allocation2 + $0x1a8] sm:$0xff] 0.0
      %121 = vst [vmem:[#allocation2 + $0x1b0] sm:$0xff] 0.0
      %122 = vst [vmem:[#allocation2 + $0x1b8] sm:$0xff] 0.0
      %123 = vst [vmem:[#allocation2 + $0x1c0] sm:$0xff] 0.0
      %124 = vst [vmem:[#allocation2 + $0x1c8] sm:$0xff] 0.0
      %125 = vst [vmem:[#allocation2 + $0x1d0] sm:$0xff] 0.0
      %126 = vst [vmem:[#allocation2 + $0x1d8] sm:$0xff] 0.0
      %127 = vst [vmem:[#allocation2 + $0x1e0] sm:$0xff] 0.0
      %128 = vst [vmem:[#allocation2 + $0x1e8] sm:$0xff] 0.0
      %129 = vst [vmem:[#allocation2 + $0x1f0] sm:$0xff] 0.0
      %130 = vst [vmem:[#allocation2 + $0x1f8] sm:$0xff] 0.0
    $region21: #{tpu_custom_call.1} parent=1 // pred_fallthru
      _
    %v131 = vld [vmem:[#allocation2] sm:$0xff]
    %v132 = vld [vmem:[#allocation2 + $0x8] sm:$0xff]
    %v133 = vld [vmem:[#allocation2 + $0x10] sm:$0xff]
    %v134 = vld [vmem:[#allocation2 + $0x18] sm:$0xff]
    %v135 = vld [vmem:[#allocation2 + $0x20] sm:$0xff]
    %v136 = vld [vmem:[#allocation2 + $0x28] sm:$0xff]
    %v137 = vld [vmem:[#allocation2 + $0x30] sm:$0xff]
    %v138 = vld [vmem:[#allocation2 + $0x38] sm:$0xff]
    %v139 = vld [vmem:[#allocation2 + $0x40] sm:$0xff]
    %v140 = vld [vmem:[#allocation2 + $0x48] sm:$0xff]
    %v141 = vld [vmem:[#allocation2 + $0x50] sm:$0xff]
    %v142 = vld [vmem:[#allocation2 + $0x58] sm:$0xff]
    %v143 = vld [vmem:[#allocation2 + $0x60] sm:$0xff]
    %v144 = vld [vmem:[#allocation2 + $0x68] sm:$0xff]
    %v145 = vld [vmem:[#allocation2 + $0x70] sm:$0xff]
    %v146 = vld [vmem:[#allocation2 + $0x78] sm:$0xff]
    %v147 = vld [vmem:[#allocation2 + $0x80] sm:$0xff]
    %v148 = vld [vmem:[#allocation2 + $0x88] sm:$0xff]
    %v149 = vld [vmem:[#allocation2 + $0x90] sm:$0xff]
    %v150 = vld [vmem:[#allocation2 + $0x98] sm:$0xff]
    %v151 = vld [vmem:[#allocation2 + $0xa0] sm:$0xff]
    %v152 = vld [vmem:[#allocation2 + $0xa8] sm:$0xff]
    %v153 = vld [vmem:[#allocation2 + $0xb0] sm:$0xff]
    %v154 = vld [vmem:[#allocation2 + $0xb8] sm:$0xff]
    %v155 = vld [vmem:[#allocation2 + $0xc0] sm:$0xff]
    %v156 = vld [vmem:[#allocation2 + $0xc8] sm:$0xff]
    %v157 = vld [vmem:[#allocation2 + $0xd0] sm:$0xff]
    %v158 = vld [vmem:[#allocation2 + $0xd8] sm:$0xff]
    %v159 = vld [vmem:[#allocation2 + $0xe0] sm:$0xff]
    %v160 = vld [vmem:[#allocation2 + $0xe8] sm:$0xff]
    %v161 = vld [vmem:[#allocation2 + $0xf0] sm:$0xff]
    %v162 = vld [vmem:[#allocation2 + $0xf8] sm:$0xff]
    %v163 = vld [vmem:[#allocation2 + $0x100] sm:$0xff]
    %v164 = vld [vmem:[#allocation2 + $0x108] sm:$0xff]
    %v165 = vld [vmem:[#allocation2 + $0x110] sm:$0xff]
    %v166 = vld [vmem:[#allocation2 + $0x118] sm:$0xff]
    %v167 = vld [vmem:[#allocation2 + $0x120] sm:$0xff]
    %v168 = vld [vmem:[#allocation2 + $0x128] sm:$0xff]
    %v169 = vld [vmem:[#allocation2 + $0x130] sm:$0xff]
    %v170 = vld [vmem:[#allocation2 + $0x138] sm:$0xff]
    %v171 = vld [vmem:[#allocation2 + $0x140] sm:$0xff]
    %v172 = vld [vmem:[#allocation2 + $0x148] sm:$0xff]
    %v173 = vld [vmem:[#allocation2 + $0x150] sm:$0xff]
    %v174 = vld [vmem:[#allocation2 + $0x158] sm:$0xff]
    %v175 = vld [vmem:[#allocation2 + $0x160] sm:$0xff]
    %v176 = vld [vmem:[#allocation2 + $0x168] sm:$0xff]
    %v177 = vld [vmem:[#allocation2 + $0x170] sm:$0xff]
    %v178 = vld [vmem:[#allocation2 + $0x178] sm:$0xff]
    %v179 = vld [vmem:[#allocation2 + $0x180] sm:$0xff]
    %v180 = vld [vmem:[#allocation2 + $0x188] sm:$0xff]
    %v181 = vld [vmem:[#allocation2 + $0x190] sm:$0xff]
    %v182 = vld [vmem:[#allocation2 + $0x198] sm:$0xff]
    %v183 = vld [vmem:[#allocation2 + $0x1a0] sm:$0xff]
    %v184 = vld [vmem:[#allocation2 + $0x1a8] sm:$0xff]
    %v185 = vld [vmem:[#allocation2 + $0x1b0] sm:$0xff]
    %v186 = vld [vmem:[#allocation2 + $0x1b8] sm:$0xff]
    %v187 = vld [vmem:[#allocation2 + $0x1c0] sm:$0xff]
    %v188 = vld [vmem:[#allocation2 + $0x1c8] sm:$0xff]
    %v189 = vld [vmem:[#allocation2 + $0x1d0] sm:$0xff]
    %v190 = vld [vmem:[#allocation2 + $0x1d8] sm:$0xff]
    %v191 = vld [vmem:[#allocation2 + $0x1e0] sm:$0xff]
    %v192 = vld [vmem:[#allocation2 + $0x1e8] sm:$0xff]
    %v193 = vld [vmem:[#allocation2 + $0x1f0] sm:$0xff]
    %v194 = vld [vmem:[#allocation2 + $0x1f8] sm:$0xff]
    %v195 = vld [vmem:[#allocation6] sm:$0xff]
    %v196 = vld [vmem:[#allocation6 + $0x8] sm:$0xf]
    %v197 = vld [vmem:[#allocation6 + $0xc] sm:$0xff]
    %v198 = vld [vmem:[#allocation6 + $0x14] sm:$0xf]
    %v199 = vld [vmem:[#allocation6 + $0x18] sm:$0xff]
    %v200 = vld [vmem:[#allocation6 + $0x20] sm:$0xf]
    %v201 = vld [vmem:[#allocation6 + $0x24] sm:$0xff]
    %v202 = vld [vmem:[#allocation6 + $0x2c] sm:$0xf]
    %v203 = vld [vmem:[#allocation6 + $0x30] sm:$0xff]
    %v204 = vld [vmem:[#allocation6 + $0x38] sm:$0xf]
    %v205 = vld [vmem:[#allocation6 + $0x3c] sm:$0xff]
    %v206 = vld [vmem:[#allocation6 + $0x44] sm:$0xf]
    %v207 = vld [vmem:[#allocation6 + $0x48] sm:$0xff]
    %v208 = vld [vmem:[#allocation6 + $0x50] sm:$0xf]
    %v209 = vld [vmem:[#allocation6 + $0x54] sm:$0xff]
    %v210 = vld [vmem:[#allocation6 + $0x5c] sm:$0xf]
    %v211 = vld [vmem:[#allocation6 + $0x60] sm:$0xff]
    %v212 = vld [vmem:[#allocation6 + $0x68] sm:$0xf]
    %v213 = vld [vmem:[#allocation6 + $0x6c] sm:$0xff]
    %v214 = vld [vmem:[#allocation6 + $0x74] sm:$0xf]
    %v215 = vld [vmem:[#allocation6 + $0x78] sm:$0xff]
    %v216 = vld [vmem:[#allocation6 + $0x80] sm:$0xf]
    %v217 = vld [vmem:[#allocation6 + $0x84] sm:$0xff]
    %v218 = vld [vmem:[#allocation6 + $0x8c] sm:$0xf]
    %v219 = vld [vmem:[#allocation6 + $0x90] sm:$0xff]
    %v220 = vld [vmem:[#allocation6 + $0x98] sm:$0xf]
    %v221 = vld [vmem:[#allocation6 + $0x9c] sm:$0xff]
    %v222 = vld [vmem:[#allocation6 + $0xa4] sm:$0xf]
    %v223 = vld [vmem:[#allocation6 + $0xa8] sm:$0xff]
    %v224 = vld [vmem:[#allocation6 + $0xb0] sm:$0xf]
    %v225 = vld [vmem:[#allocation6 + $0xb4] sm:$0xff]
    %v226 = vld [vmem:[#allocation6 + $0xbc] sm:$0xf]
    %v227 = vld [vmem:[#allocation6 + $0xc0] sm:$0xff]
    %v228 = vld [vmem:[#allocation6 + $0xc8] sm:$0xf]
    %v229 = vld [vmem:[#allocation6 + $0xcc] sm:$0xff]
    %v230 = vld [vmem:[#allocation6 + $0xd4] sm:$0xf]
    %v231 = vld [vmem:[#allocation6 + $0xd8] sm:$0xff]
    %v232 = vld [vmem:[#allocation6 + $0xe0] sm:$0xf]
    %v233 = vld [vmem:[#allocation6 + $0xe4] sm:$0xff]
    %v234 = vld [vmem:[#allocation6 + $0xec] sm:$0xf]
    %v235 = vld [vmem:[#allocation6 + $0xf0] sm:$0xff]
    %v236 = vld [vmem:[#allocation6 + $0xf8] sm:$0xf]
    %v237 = vld [vmem:[#allocation6 + $0xfc] sm:$0xff]
    %v238 = vld [vmem:[#allocation6 + $0x104] sm:$0xf]
    %v239 = vld [vmem:[#allocation6 + $0x108] sm:$0xff]
    %v240 = vld [vmem:[#allocation6 + $0x110] sm:$0xf]
    %v241 = vld [vmem:[#allocation6 + $0x114] sm:$0xff]
    %v242 = vld [vmem:[#allocation6 + $0x11c] sm:$0xf]
    %v243 = vld [vmem:[#allocation6 + $0x120] sm:$0xff]
    %v244 = vld [vmem:[#allocation6 + $0x128] sm:$0xf]
    %v245 = vld [vmem:[#allocation6 + $0x12c] sm:$0xff]
    %v246 = vld [vmem:[#allocation6 + $0x134] sm:$0xf]
    %v247 = vld [vmem:[#allocation6 + $0x138] sm:$0xff]
    %v248 = vld [vmem:[#allocation6 + $0x140] sm:$0xf]
    %v249 = vld [vmem:[#allocation6 + $0x144] sm:$0xff]
    %v250 = vld [vmem:[#allocation6 + $0x14c] sm:$0xf]
    %v251 = vld [vmem:[#allocation6 + $0x150] sm:$0xff]
    %v252 = vld [vmem:[#allocation6 + $0x158] sm:$0xf]
    %v253 = vld [vmem:[#allocation6 + $0x15c] sm:$0xff]
    %v254 = vld [vmem:[#allocation6 + $0x164] sm:$0xf]
    %v255 = vld [vmem:[#allocation6 + $0x168] sm:$0xff]
    %v256 = vld [vmem:[#allocation6 + $0x170] sm:$0xf]
    %v257 = vld [vmem:[#allocation6 + $0x174] sm:$0xff]
    %v258 = vld [vmem:[#allocation6 + $0x17c] sm:$0xf]
    %v259 = vld [vmem:[#allocation9] sm:$0xff]
    %v260 = vld [vmem:[#allocation9 + $0x8] sm:$0xf]
    %v261 = vld [vmem:[#allocation9 + $0xc] sm:$0xff]
    %v262 = vld [vmem:[#allocation9 + $0x14] sm:$0xf]
    %v263 = vld [vmem:[#allocation9 + $0x18] sm:$0xff]
    %v264 = vld [vmem:[#allocation9 + $0x20] sm:$0xf]
    %v265 = vld [vmem:[#allocation9 + $0x24] sm:$0xff]
    %v266 = vld [vmem:[#allocation9 + $0x2c] sm:$0xf]
    %v267 = vld [vmem:[#allocation9 + $0x30] sm:$0xff]
    %v268 = vld [vmem:[#allocation9 + $0x38] sm:$0xf]
    %v269 = vld [vmem:[#allocation9 + $0x3c] sm:$0xff]
    %v270 = vld [vmem:[#allocation9 + $0x44] sm:$0xf]
    %v271 = vld [vmem:[#allocation9 + $0x48] sm:$0xff]
    %v272 = vld [vmem:[#allocation9 + $0x50] sm:$0xf]
    %v273 = vld [vmem:[#allocation9 + $0x54] sm:$0xff]
    %v274 = vld [vmem:[#allocation9 + $0x5c] sm:$0xf]
    %v275 = vld [vmem:[#allocation9 + $0x60] sm:$0xff]
    %v276 = vld [vmem:[#allocation9 + $0x68] sm:$0xf]
    %v277 = vld [vmem:[#allocation9 + $0x6c] sm:$0xff]
    %v278 = vld [vmem:[#allocation9 + $0x74] sm:$0xf]
    %v279 = vld [vmem:[#allocation9 + $0x78] sm:$0xff]
    %v280 = vld [vmem:[#allocation9 + $0x80] sm:$0xf]
    %v281 = vld [vmem:[#allocation9 + $0x84] sm:$0xff]
    %v282 = vld [vmem:[#allocation9 + $0x8c] sm:$0xf]
    %v283 = vld [vmem:[#allocation9 + $0x90] sm:$0xff]
    %v284 = vld [vmem:[#allocation9 + $0x98] sm:$0xf]
    %v285 = vld [vmem:[#allocation9 + $0x9c] sm:$0xff]
    %v286 = vld [vmem:[#allocation9 + $0xa4] sm:$0xf]
    %v287 = vld [vmem:[#allocation9 + $0xa8] sm:$0xff]
    %v288 = vld [vmem:[#allocation9 + $0xb0] sm:$0xf]
    %v289 = vld [vmem:[#allocation9 + $0xb4] sm:$0xff]
    %v290 = vld [vmem:[#allocation9 + $0xbc] sm:$0xf]
    %v291 = vld [vmem:[#allocation9 + $0xc0] sm:$0xff]
    %v292 = vld [vmem:[#allocation9 + $0xc8] sm:$0xf]
    %v293 = vld [vmem:[#allocation9 + $0xcc] sm:$0xff]
    %v294 = vld [vmem:[#allocation9 + $0xd4] sm:$0xf]
    %v295 = vld [vmem:[#allocation9 + $0xd8] sm:$0xff]
    %v296 = vld [vmem:[#allocation9 + $0xe0] sm:$0xf]
    %v297 = vld [vmem:[#allocation9 + $0xe4] sm:$0xff]
    %v298 = vld [vmem:[#allocation9 + $0xec] sm:$0xf]
    %v299 = vld [vmem:[#allocation9 + $0xf0] sm:$0xff]
    %v300 = vld [vmem:[#allocation9 + $0xf8] sm:$0xf]
    %v301 = vld [vmem:[#allocation9 + $0xfc] sm:$0xff]
    %v302 = vld [vmem:[#allocation9 + $0x104] sm:$0xf]
    %v303 = vld [vmem:[#allocation9 + $0x108] sm:$0xff]
    %v304 = vld [vmem:[#allocation9 + $0x110] sm:$0xf]
    %v305 = vld [vmem:[#allocation9 + $0x114] sm:$0xff]
    %v306 = vld [vmem:[#allocation9 + $0x11c] sm:$0xf]
    %v307 = vld [vmem:[#allocation9 + $0x120] sm:$0xff]
    %v308 = vld [vmem:[#allocation9 + $0x128] sm:$0xf]
    %v309 = vld [vmem:[#allocation9 + $0x12c] sm:$0xff]
    %v310 = vld [vmem:[#allocation9 + $0x134] sm:$0xf]
    %v311 = vld [vmem:[#allocation9 + $0x138] sm:$0xff]
    %v312 = vld [vmem:[#allocation9 + $0x140] sm:$0xf]
    %v313 = vld [vmem:[#allocation9 + $0x144] sm:$0xff]
    %v314 = vld [vmem:[#allocation9 + $0x14c] sm:$0xf]
    %v315 = vld [vmem:[#allocation9 + $0x150] sm:$0xff]
    %v316 = vld [vmem:[#allocation9 + $0x158] sm:$0xf]
    %v317 = vld [vmem:[#allocation9 + $0x15c] sm:$0xff]
    %v318 = vld [vmem:[#allocation9 + $0x164] sm:$0xf]
    %v319 = vld [vmem:[#allocation9 + $0x168] sm:$0xff]
    %v320 = vld [vmem:[#allocation9 + $0x170] sm:$0xf]
    %v321 = vld [vmem:[#allocation9 + $0x174] sm:$0xff]
    %v322 = vld [vmem:[#allocation9 + $0x17c] sm:$0xf]
    %v387 = vunpack.c.l.b16 %v195
    %v388 = vunpack.c.h.b16 %v195
    %v389 = vunpack.c.l.b16 %v196
    %v390 = vunpack.c.l.b16 %v197
    %v391 = vunpack.c.h.b16 %v197
    %v392 = vunpack.c.l.b16 %v198
    %v393 = vunpack.c.l.b16 %v199
    %v394 = vunpack.c.h.b16 %v199
    %v395 = vunpack.c.l.b16 %v200
    %v396 = vunpack.c.l.b16 %v201
    %v397 = vunpack.c.h.b16 %v201
    %v398 = vunpack.c.l.b16 %v202
    %v399 = vunpack.c.l.b16 %v203
    %v400 = vunpack.c.h.b16 %v203
    %v401 = vunpack.c.l.b16 %v204
    %v402 = vunpack.c.l.b16 %v205
    %v403 = vunpack.c.h.b16 %v205
    %v404 = vunpack.c.l.b16 %v206
    %v405 = vunpack.c.l.b16 %v207
    %v406 = vunpack.c.h.b16 %v207
    %v407 = vunpack.c.l.b16 %v208
    %v408 = vunpack.c.l.b16 %v209
    %v409 = vunpack.c.h.b16 %v209
    %v410 = vunpack.c.l.b16 %v210
    %v411 = vunpack.c.l.b16 %v211
    %v412 = vunpack.c.h.b16 %v211
    %v413 = vunpack.c.l.b16 %v212
    %v414 = vunpack.c.l.b16 %v213
    %v415 = vunpack.c.h.b16 %v213
    %v416 = vunpack.c.l.b16 %v214
    %v417 = vunpack.c.l.b16 %v215
    %v418 = vunpack.c.h.b16 %v215
    %v419 = vunpack.c.l.b16 %v216
    %v420 = vunpack.c.l.b16 %v217
    %v421 = vunpack.c.h.b16 %v217
    %v422 = vunpack.c.l.b16 %v218
    %v423 = vunpack.c.l.b16 %v219
    %v424 = vunpack.c.h.b16 %v219
    %v425 = vunpack.c.l.b16 %v220
    %v426 = vunpack.c.l.b16 %v221
    %v427 = vunpack.c.h.b16 %v221
    %v428 = vunpack.c.l.b16 %v222
    %v429 = vunpack.c.l.b16 %v223
    %v430 = vunpack.c.h.b16 %v223
    %v431 = vunpack.c.l.b16 %v224
    %v432 = vunpack.c.l.b16 %v225
    %v433 = vunpack.c.h.b16 %v225
    %v434 = vunpack.c.l.b16 %v226
    %v435 = vunpack.c.l.b16 %v227
    %v436 = vunpack.c.h.b16 %v227
    %v437 = vunpack.c.l.b16 %v228
    %v438 = vunpack.c.l.b16 %v229
    %v439 = vunpack.c.h.b16 %v229
    %v440 = vunpack.c.l.b16 %v230
    %v441 = vunpack.c.l.b16 %v231
    %v442 = vunpack.c.h.b16 %v231
    %v443 = vunpack.c.l.b16 %v232
    %v444 = vunpack.c.l.b16 %v233
    %v445 = vunpack.c.h.b16 %v233
    %v446 = vunpack.c.l.b16 %v234
    %v447 = vunpack.c.l.b16 %v235
    %v448 = vunpack.c.h.b16 %v235
    %v449 = vunpack.c.l.b16 %v236
    %v450 = vunpack.c.l.b16 %v237
    %v451 = vunpack.c.h.b16 %v237
    %v452 = vunpack.c.l.b16 %v238
    %v453 = vunpack.c.l.b16 %v239
    %v454 = vunpack.c.h.b16 %v239
    %v455 = vunpack.c.l.b16 %v240
    %v456 = vunpack.c.l.b16 %v241
    %v457 = vunpack.c.h.b16 %v241
    %v458 = vunpack.c.l.b16 %v242
    %v459 = vunpack.c.l.b16 %v243
    %v460 = vunpack.c.h.b16 %v243
    %v461 = vunpack.c.l.b16 %v244
    %v462 = vunpack.c.l.b16 %v245
    %v463 = vunpack.c.h.b16 %v245
    %v464 = vunpack.c.l.b16 %v246
    %v465 = vunpack.c.l.b16 %v247
    %v466 = vunpack.c.h.b16 %v247
    %v467 = vunpack.c.l.b16 %v248
    %v468 = vunpack.c.l.b16 %v249
    %v469 = vunpack.c.h.b16 %v249
    %v470 = vunpack.c.l.b16 %v250
    %v471 = vunpack.c.l.b16 %v251
    %v472 = vunpack.c.h.b16 %v251
    %v473 = vunpack.c.l.b16 %v252
    %v474 = vunpack.c.l.b16 %v253
    %v475 = vunpack.c.h.b16 %v253
    %v476 = vunpack.c.l.b16 %v254
    %v477 = vunpack.c.l.b16 %v255
    %v478 = vunpack.c.h.b16 %v255
    %v479 = vunpack.c.l.b16 %v256
    %v480 = vunpack.c.l.b16 %v257
    %v481 = vunpack.c.h.b16 %v257
    %v482 = vunpack.c.l.b16 %v258
    %v483 = vpack.c.b16 %v390, %v387
    %v484 = vpack.c.b16 %v391, %v388
    %v485 = vpack.c.b16 %v392, %v389
    %v486 = vpack.c.b16 %v396, %v393
    %v487 = vpack.c.b16 %v397, %v394
    %v488 = vpack.c.b16 %v398, %v395
    %v489 = vpack.c.b16 %v402, %v399
    %v490 = vpack.c.b16 %v403, %v400
    %v491 = vpack.c.b16 %v404, %v401
    %v492 = vpack.c.b16 %v408, %v405
    %v493 = vpack.c.b16 %v409, %v406
    %v494 = vpack.c.b16 %v410, %v407
    %v495 = vpack.c.b16 %v414, %v411
    %v496 = vpack.c.b16 %v415, %v412
    %v497 = vpack.c.b16 %v416, %v413
    %v498 = vpack.c.b16 %v420, %v417
    %v499 = vpack.c.b16 %v421, %v418
    %v500 = vpack.c.b16 %v422, %v419
    %v501 = vpack.c.b16 %v426, %v423
    %v502 = vpack.c.b16 %v427, %v424
    %v503 = vpack.c.b16 %v428, %v425
    %v504 = vpack.c.b16 %v432, %v429
    %v505 = vpack.c.b16 %v433, %v430
    %v506 = vpack.c.b16 %v434, %v431
    %v507 = vpack.c.b16 %v438, %v435
    %v508 = vpack.c.b16 %v439, %v436
    %v509 = vpack.c.b16 %v440, %v437
    %v510 = vpack.c.b16 %v444, %v441
    %v511 = vpack.c.b16 %v445, %v442
    %v512 = vpack.c.b16 %v446, %v443
    %v513 = vpack.c.b16 %v450, %v447
    %v514 = vpack.c.b16 %v451, %v448
    %v515 = vpack.c.b16 %v452, %v449
    %v516 = vpack.c.b16 %v456, %v453
    %v517 = vpack.c.b16 %v457, %v454
    %v518 = vpack.c.b16 %v458, %v455
    %v519 = vpack.c.b16 %v462, %v459
    %v520 = vpack.c.b16 %v463, %v460
    %v521 = vpack.c.b16 %v464, %v461
    %v522 = vpack.c.b16 %v468, %v465
    %v523 = vpack.c.b16 %v469, %v466
    %v524 = vpack.c.b16 %v470, %v467
    %v525 = vpack.c.b16 %v474, %v471
    %v526 = vpack.c.b16 %v475, %v472
    %v527 = vpack.c.b16 %v476, %v473
    %v528 = vpack.c.b16 %v480, %v477
    %v529 = vpack.c.b16 %v481, %v478
    %v530 = vpack.c.b16 %v482, %v479
    %v643 = vunpack.c.l.b16 %v259
    %v644 = vunpack.c.h.b16 %v259
    %v645 = vunpack.c.l.b16 %v260
    %v646 = vunpack.c.l.b16 %v261
    %v647 = vunpack.c.h.b16 %v261
    %v648 = vunpack.c.l.b16 %v262
    %v649 = vunpack.c.l.b16 %v263
    %v650 = vunpack.c.h.b16 %v263
    %v651 = vunpack.c.l.b16 %v264
    %v652 = vunpack.c.l.b16 %v265
    %v653 = vunpack.c.h.b16 %v265
    %v654 = vunpack.c.l.b16 %v266
    %v655 = vunpack.c.l.b16 %v267
    %v656 = vunpack.c.h.b16 %v267
    %v657 = vunpack.c.l.b16 %v268
    %v658 = vunpack.c.l.b16 %v269
    %v659 = vunpack.c.h.b16 %v269
    %v660 = vunpack.c.l.b16 %v270
    %v661 = vunpack.c.l.b16 %v271
    %v662 = vunpack.c.h.b16 %v271
    %v663 = vunpack.c.l.b16 %v272
    %v664 = vunpack.c.l.b16 %v273
    %v665 = vunpack.c.h.b16 %v273
    %v666 = vunpack.c.l.b16 %v274
    %v667 = vunpack.c.l.b16 %v275
    %v668 = vunpack.c.h.b16 %v275
    %v669 = vunpack.c.l.b16 %v276
    %v670 = vunpack.c.l.b16 %v277
    %v671 = vunpack.c.h.b16 %v277
    %v672 = vunpack.c.l.b16 %v278
    %v673 = vunpack.c.l.b16 %v279
    %v674 = vunpack.c.h.b16 %v279
    %v675 = vunpack.c.l.b16 %v280
    %v676 = vunpack.c.l.b16 %v281
    %v677 = vunpack.c.h.b16 %v281
    %v678 = vunpack.c.l.b16 %v282
    %v679 = vunpack.c.l.b16 %v283
    %v680 = vunpack.c.h.b16 %v283
    %v681 = vunpack.c.l.b16 %v284
    %v682 = vunpack.c.l.b16 %v285
    %v683 = vunpack.c.h.b16 %v285
    %v684 = vunpack.c.l.b16 %v286
    %v685 = vunpack.c.l.b16 %v287
    %v686 = vunpack.c.h.b16 %v287
    %v687 = vunpack.c.l.b16 %v288
    %v688 = vunpack.c.l.b16 %v289
    %v689 = vunpack.c.h.b16 %v289
    %v690 = vunpack.c.l.b16 %v290
    %v691 = vunpack.c.l.b16 %v291
    %v692 = vunpack.c.h.b16 %v291
    %v693 = vunpack.c.l.b16 %v292
    %v694 = vunpack.c.l.b16 %v293
    %v695 = vunpack.c.h.b16 %v293
    %v696 = vunpack.c.l.b16 %v294
    %v697 = vunpack.c.l.b16 %v295
    %v698 = vunpack.c.h.b16 %v295
    %v699 = vunpack.c.l.b16 %v296
    %v700 = vunpack.c.l.b16 %v297
    %v701 = vunpack.c.h.b16 %v297
    %v702 = vunpack.c.l.b16 %v298
    %v703 = vunpack.c.l.b16 %v299
    %v704 = vunpack.c.h.b16 %v299
    %v705 = vunpack.c.l.b16 %v300
    %v706 = vunpack.c.l.b16 %v301
    %v707 = vunpack.c.h.b16 %v301
    %v708 = vunpack.c.l.b16 %v302
    %v709 = vunpack.c.l.b16 %v303
    %v710 = vunpack.c.h.b16 %v303
    %v711 = vunpack.c.l.b16 %v304
    %v712 = vunpack.c.l.b16 %v305
    %v713 = vunpack.c.h.b16 %v305
    %v714 = vunpack.c.l.b16 %v306
    %v715 = vunpack.c.l.b16 %v307
    %v716 = vunpack.c.h.b16 %v307
    %v717 = vunpack.c.l.b16 %v308
    %v718 = vunpack.c.l.b16 %v309
    %v719 = vunpack.c.h.b16 %v309
    %v720 = vunpack.c.l.b16 %v310
    %v721 = vunpack.c.l.b16 %v311
    %v722 = vunpack.c.h.b16 %v311
    %v723 = vunpack.c.l.b16 %v312
    %v724 = vunpack.c.l.b16 %v313
    %v725 = vunpack.c.h.b16 %v313
    %v726 = vunpack.c.l.b16 %v314
    %v727 = vunpack.c.l.b16 %v315
    %v728 = vunpack.c.h.b16 %v315
    %v729 = vunpack.c.l.b16 %v316
    %v730 = vunpack.c.l.b16 %v317
    %v731 = vunpack.c.h.b16 %v317
    %v732 = vunpack.c.l.b16 %v318
    %v733 = vunpack.c.l.b16 %v319
    %v734 = vunpack.c.h.b16 %v319
    %v735 = vunpack.c.l.b16 %v320
    %v736 = vunpack.c.l.b16 %v321
    %v737 = vunpack.c.h.b16 %v321
    %v738 = vunpack.c.l.b16 %v322
    %v739 = vpack.c.b16 %v646, %v643
    %v740 = vpack.c.b16 %v647, %v644
    %v741 = vpack.c.b16 %v648, %v645
    %v742 = vpack.c.b16 %v652, %v649
    %v743 = vpack.c.b16 %v653, %v650
    %v744 = vpack.c.b16 %v654, %v651
    %v745 = vpack.c.b16 %v658, %v655
    %v746 = vpack.c.b16 %v659, %v656
    %v747 = vpack.c.b16 %v660, %v657
    %v748 = vpack.c.b16 %v664, %v661
    %v749 = vpack.c.b16 %v665, %v662
    %v750 = vpack.c.b16 %v666, %v663
    %v751 = vpack.c.b16 %v670, %v667
    %v752 = vpack.c.b16 %v671, %v668
    %v753 = vpack.c.b16 %v672, %v669
    %v754 = vpack.c.b16 %v676, %v673
    %v755 = vpack.c.b16 %v677, %v674
    %v756 = vpack.c.b16 %v678, %v675
    %v757 = vpack.c.b16 %v682, %v679
    %v758 = vpack.c.b16 %v683, %v680
    %v759 = vpack.c.b16 %v684, %v681
    %v760 = vpack.c.b16 %v688, %v685
    %v761 = vpack.c.b16 %v689, %v686
    %v762 = vpack.c.b16 %v690, %v687
    %v763 = vpack.c.b16 %v694, %v691
    %v764 = vpack.c.b16 %v695, %v692
    %v765 = vpack.c.b16 %v696, %v693
    %v766 = vpack.c.b16 %v700, %v697
    %v767 = vpack.c.b16 %v701, %v698
    %v768 = vpack.c.b16 %v702, %v699
    %v769 = vpack.c.b16 %v706, %v703
    %v770 = vpack.c.b16 %v707, %v704
    %v771 = vpack.c.b16 %v708, %v705
    %v772 = vpack.c.b16 %v712, %v709
    %v773 = vpack.c.b16 %v713, %v710
    %v774 = vpack.c.b16 %v714, %v711
    %v775 = vpack.c.b16 %v718, %v715
    %v776 = vpack.c.b16 %v719, %v716
    %v777 = vpack.c.b16 %v720, %v717
    %v778 = vpack.c.b16 %v724, %v721
    %v779 = vpack.c.b16 %v725, %v722
    %v780 = vpack.c.b16 %v726, %v723
    %v781 = vpack.c.b16 %v730, %v727
    %v782 = vpack.c.b16 %v731, %v728
    %v783 = vpack.c.b16 %v732, %v729
    %v784 = vpack.c.b16 %v736, %v733
    %v785 = vpack.c.b16 %v737, %v734
    %v786 = vpack.c.b16 %v738, %v735
    %835 = vmatprep.subr.bf16.mxu0 %v740
    %836 = vmatpush1.bf16.xpose.msra.mxu0 %v739
    %837 = vmatprep.subr.bf16.mxu0 %v743
    %838 = vmatpush1.bf16.xpose.msra.mxu0 %v742
    %839 = vmatprep.subr.bf16.mxu0 %v746
    %840 = vmatpush1.bf16.xpose.msra.mxu0 %v745
    %841 = vmatprep.subr.bf16.mxu0 %v749
    %842 = vmatpush1.bf16.xpose.msra.mxu0 %v748
    %843 = vmatprep.subr.bf16.mxu0 %v752
    %844 = vmatpush1.bf16.xpose.msra.mxu0 %v751
    %845 = vmatprep.subr.bf16.mxu0 %v755
    %846 = vmatpush1.bf16.xpose.msra.mxu0 %v754
    %847 = vmatprep.subr.bf16.mxu0 %v758
    %848 = vmatpush1.bf16.xpose.msra.mxu0 %v757
    %849 = vmatprep.subr.bf16.mxu0 %v761
    %850 = vmatpush1.bf16.xpose.msra.mxu0 %v760
    %851 = vmatprep.subr.bf16.mxu0 %v764
    %852 = vmatpush1.bf16.xpose.msra.mxu0 %v763
    %853 = vmatprep.subr.bf16.mxu0 %v767
    %854 = vmatpush1.bf16.xpose.msra.mxu0 %v766
    %855 = vmatprep.subr.bf16.mxu0 %v770
    %856 = vmatpush1.bf16.xpose.msra.mxu0 %v769
    %857 = vmatprep.subr.bf16.mxu0 %v773
    %858 = vmatpush1.bf16.xpose.msra.mxu0 %v772
    %859 = vmatprep.subr.bf16.mxu0 %v776
    %860 = vmatpush1.bf16.xpose.msra.mxu0 %v775
    %861 = vmatprep.subr.bf16.mxu0 %v779
    %862 = vmatpush1.bf16.xpose.msra.mxu0 %v778
    %863 = vmatprep.subr.bf16.mxu0 %v782
    %864 = vmatpush1.bf16.xpose.msra.mxu0 %v781
    %865 = vmatprep.subr.bf16.mxu0 %v785
    %866 = vmatpush1.bf16.xpose.msra.mxu0 %v784
    %867 = vmatprep.mubr.bf16.mxu0 %v484
    %868 = vmatmul.mubr.bf16.gmra.mrb[0].mxu0 %v483
    %v869 = vpop.f32.mrb[0].mxu0
    %v870 = vadd.f32 0.0, %v869
    %v871 = vpop.f32.mrb[0].mxu0
    %v872 = vadd.f32 0.0, %v871
    %v873 = vpop.f32.mrb[0].mxu0
    %v874 = vadd.f32 0.0, %v873
    %v875 = vpop.f32.mrb[0].mxu0
    %v876 = vadd.f32 0.0, %v875
    %877 = vmatprep.mubr.bf16.mxu0 %v487
    %878 = vmatmul.mubr.bf16.gmra.mrb[0].mxu0 %v486
    %v879 = vpop.f32.mrb[0].mxu0
    %v880 = vadd.f32 0.0, %v879
    %v881 = vpop.f32.mrb[0].mxu0
    %v882 = vadd.f32 0.0, %v881
    %v883 = vpop.f32.mrb[0].mxu0
    %v884 = vadd.f32 0.0, %v883
    %v885 = vpop.f32.mrb[0].mxu0
    %v886 = vadd.f32 0.0, %v885
    %887 = vmatprep.mubr.bf16.mxu0 %v490
    %888 = vmatmul.mubr.bf16.gmra.mrb[0].mxu0 %v489
    %v889 = vpop.f32.mrb[0].mxu0
    %v890 = vadd.f32 0.0, %v889
    %v891 = vpop.f32.mrb[0].mxu0
    %v892 = vadd.f32 0.0, %v891
    %v893 = vpop.f32.mrb[0].mxu0
    %v894 = vadd.f32 0.0, %v893
    %v895 = vpop.f32.mrb[0].mxu0
    %v896 = vadd.f32 0.0, %v895
    %897 = vmatprep.mubr.bf16.mxu0 %v493
    %898 = vmatmul.mubr.bf16.gmra.mrb[0].mxu0 %v492
    %v899 = vpop.f32.mrb[0].mxu0
    %v900 = vadd.f32 0.0, %v899
    %v901 = vpop.f32.mrb[0].mxu0
    %v902 = vadd.f32 0.0, %v901
    %v903 = vpop.f32.mrb[0].mxu0
    %v904 = vadd.f32 0.0, %v903
    %v905 = vpop.f32.mrb[0].mxu0
    %v906 = vadd.f32 0.0, %v905
    %907 = vmatprep.mubr.bf16.mxu0 %v496
    %908 = vmatmul.mubr.bf16.gmra.mrb[0].mxu0 %v495
    %v909 = vpop.f32.mrb[0].mxu0
    %v910 = vadd.f32 0.0, %v909
    %v911 = vpop.f32.mrb[0].mxu0
    %v912 = vadd.f32 0.0, %v911
    %v913 = vpop.f32.mrb[0].mxu0
    %v914 = vadd.f32 0.0, %v913
    %v915 = vpop.f32.mrb[0].mxu0
    %v916 = vadd.f32 0.0, %v915
    %917 = vmatprep.mubr.bf16.mxu0 %v499
    %918 = vmatmul.mubr.bf16.gmra.mrb[0].mxu0 %v498
    %v919 = vpop.f32.mrb[0].mxu0
    %v920 = vadd.f32 0.0, %v919
    %v921 = vpop.f32.mrb[0].mxu0
    %v922 = vadd.f32 0.0, %v921
    %v923 = vpop.f32.mrb[0].mxu0
    %v924 = vadd.f32 0.0, %v923
    %v925 = vpop.f32.mrb[0].mxu0
    %v926 = vadd.f32 0.0, %v925
    %927 = vmatprep.mubr.bf16.mxu0 %v502
    %928 = vmatmul.mubr.bf16.gmra.mrb[0].mxu0 %v501
    %v929 = vpop.f32.mrb[0].mxu0
    %v930 = vadd.f32 0.0, %v929
    %v931 = vpop.f32.mrb[0].mxu0
    %v932 = vadd.f32 0.0, %v931
    %v933 = vpop.f32.mrb[0].mxu0
    %v934 = vadd.f32 0.0, %v933
    %v935 = vpop.f32.mrb[0].mxu0
    %v936 = vadd.f32 0.0, %v935
    %937 = vmatprep.mubr.bf16.mxu0 %v505
    %938 = vmatmul.mubr.bf16.gmra.mrb[0].mxu0 %v504
    %v939 = vpop.f32.mrb[0].mxu0
    %v940 = vadd.f32 0.0, %v939
    %v941 = vpop.f32.mrb[0].mxu0
    %v942 = vadd.f32 0.0, %v941
    %v943 = vpop.f32.mrb[0].mxu0
    %v944 = vadd.f32 0.0, %v943
    %v945 = vpop.f32.mrb[0].mxu0
    %v946 = vadd.f32 0.0, %v945
    %947 = vmatprep.mubr.bf16.mxu0 %v508
    %948 = vmatmul.mubr.bf16.gmra.mrb[0].mxu0 %v507
    %v949 = vpop.f32.mrb[0].mxu0
    %v950 = vadd.f32 0.0, %v949
    %v951 = vpop.f32.mrb[0].mxu0
    %v952 = vadd.f32 0.0, %v951
    %v953 = vpop.f32.mrb[0].mxu0
    %v954 = vadd.f32 0.0, %v953
    %v955 = vpop.f32.mrb[0].mxu0
    %v956 = vadd.f32 0.0, %v955
    %957 = vmatprep.mubr.bf16.mxu0 %v511
    %958 = vmatmul.mubr.bf16.gmra.mrb[0].mxu0 %v510
    %v959 = vpop.f32.mrb[0].mxu0
    %v960 = vadd.f32 0.0, %v959
    %v961 = vpop.f32.mrb[0].mxu0
    %v962 = vadd.f32 0.0, %v961
    %v963 = vpop.f32.mrb[0].mxu0
    %v964 = vadd.f32 0.0, %v963
    %v965 = vpop.f32.mrb[0].mxu0
    %v966 = vadd.f32 0.0, %v965
    %967 = vmatprep.mubr.bf16.mxu0 %v514
    %968 = vmatmul.mubr.bf16.gmra.mrb[0].mxu0 %v513
    %v969 = vpop.f32.mrb[0].mxu0
    %v970 = vadd.f32 0.0, %v969
    %v971 = vpop.f32.mrb[0].mxu0
    %v972 = vadd.f32 0.0, %v971
    %v973 = vpop.f32.mrb[0].mxu0
    %v974 = vadd.f32 0.0, %v973
    %v975 = vpop.f32.mrb[0].mxu0
    %v976 = vadd.f32 0.0, %v975
    %977 = vmatprep.mubr.bf16.mxu0 %v517
    %978 = vmatmul.mubr.bf16.gmra.mrb[0].mxu0 %v516
    %v979 = vpop.f32.mrb[0].mxu0
    %v980 = vadd.f32 0.0, %v979
    %v981 = vpop.f32.mrb[0].mxu0
    %v982 = vadd.f32 0.0, %v981
    %v983 = vpop.f32.mrb[0].mxu0
    %v984 = vadd.f32 0.0, %v983
    %v985 = vpop.f32.mrb[0].mxu0
    %v986 = vadd.f32 0.0, %v985
    %987 = vmatprep.mubr.bf16.mxu0 %v520
    %988 = vmatmul.mubr.bf16.gmra.mrb[0].mxu0 %v519
    %v989 = vpop.f32.mrb[0].mxu0
    %v990 = vadd.f32 0.0, %v989
    %v991 = vpop.f32.mrb[0].mxu0
    %v992 = vadd.f32 0.0, %v991
    %v993 = vpop.f32.mrb[0].mxu0
    %v994 = vadd.f32 0.0, %v993
    %v995 = vpop.f32.mrb[0].mxu0
    %v996 = vadd.f32 0.0, %v995
    %997 = vmatprep.mubr.bf16.mxu0 %v523
    %998 = vmatmul.mubr.bf16.gmra.mrb[0].mxu0 %v522
    %v999 = vpop.f32.mrb[0].mxu0
    %v1000 = vadd.f32 0.0, %v999
    %v1001 = vpop.f32.mrb[0].mxu0
    %v1002 = vadd.f32 0.0, %v1001
    %v1003 = vpop.f32.mrb[0].mxu0
    %v1004 = vadd.f32 0.0, %v1003
    %v1005 = vpop.f32.mrb[0].mxu0
    %v1006 = vadd.f32 0.0, %v1005
    %1007 = vmatprep.mubr.bf16.mxu0 %v526
    %1008 = vmatmul.mubr.bf16.gmra.mrb[0].mxu0 %v525
    %v1009 = vpop.f32.mrb[0].mxu0
    %v1010 = vadd.f32 0.0, %v1009
    %v1011 = vpop.f32.mrb[0].mxu0
    %v1012 = vadd.f32 0.0, %v1011
    %v1013 = vpop.f32.mrb[0].mxu0
    %v1014 = vadd.f32 0.0, %v1013
    %v1015 = vpop.f32.mrb[0].mxu0
    %v1016 = vadd.f32 0.0, %v1015
    %1017 = vmatprep.mubr.bf16.mxu0 %v529
    %1018 = vmatmul.mubr.bf16.gmra.mrb[0].mxu0 %v528
    %v1019 = vpop.f32.mrb[0].mxu0
    %v1020 = vadd.f32 0.0, %v1019
    %v1021 = vpop.f32.mrb[0].mxu0
    %v1022 = vadd.f32 0.0, %v1021
    %v1023 = vpop.f32.mrb[0].mxu0
    %v1024 = vadd.f32 0.0, %v1023
    %v1025 = vpop.f32.mrb[0].mxu0
    %v1026 = vadd.f32 0.0, %v1025
    %1027 = vdwg.mxu0
    %1028 = vmatprep.subr.bf16.mxu0 0
    %1029 = vmatpush1.bf16.xpose.msra.mxu0 %v741
    %1030 = vmatprep.subr.bf16.mxu0 0
    %1031 = vmatpush1.bf16.xpose.msra.mxu0 %v744
    %1032 = vmatprep.subr.bf16.mxu0 0
    %1033 = vmatpush1.bf16.xpose.msra.mxu0 %v747
    %1034 = vmatprep.subr.bf16.mxu0 0
    %1035 = vmatpush1.bf16.xpose.msra.mxu0 %v750
    %1036 = vmatprep.subr.bf16.mxu0 0
    %1037 = vmatpush1.bf16.xpose.msra.mxu0 %v753
    %1038 = vmatprep.subr.bf16.mxu0 0
    %1039 = vmatpush1.bf16.xpose.msra.mxu0 %v756
    %1040 = vmatprep.subr.bf16.mxu0 0
    %1041 = vmatpush1.bf16.xpose.msra.mxu0 %v759
    %1042 = vmatprep.subr.bf16.mxu0 0
    %1043 = vmatpush1.bf16.xpose.msra.mxu0 %v762
    %1044 = vmatprep.subr.bf16.mxu0 0
    %1045 = vmatpush1.bf16.xpose.msra.mxu0 %v765
    %1046 = vmatprep.subr.bf16.mxu0 0
    %1047 = vmatpush1.bf16.xpose.msra.mxu0 %v768
    %1048 = vmatprep.subr.bf16.mxu0 0
    %1049 = vmatpush1.bf16.xpose.msra.mxu0 %v771
    %1050 = vmatprep.subr.bf16.mxu0 0
    %1051 = vmatpush1.bf16.xpose.msra.mxu0 %v774
    %1052 = vmatprep.subr.bf16.mxu0 0
    %1053 = vmatpush1.bf16.xpose.msra.mxu0 %v777
    %1054 = vmatprep.subr.bf16.mxu0 0
    %1055 = vmatpush1.bf16.xpose.msra.mxu0 %v780
    %1056 = vmatprep.subr.bf16.mxu0 0
    %1057 = vmatpush1.bf16.xpose.msra.mxu0 %v783
    %1058 = vmatprep.subr.bf16.mxu0 0
    %1059 = vmatpush1.bf16.xpose.msra.mxu0 %v786
    %1060 = vmatprep.mubr.bf16.mxu0 0
    %1061 = vmatmul.mubr.bf16.gmra.mrb[0].mxu0 %v485
    %v1062 = vpop.f32.mrb[0].mxu0
    %v1063 = vadd.f32 %v870, %v1062
    %v1064 = vpop.f32.mrb[0].mxu0
    %v1065 = vadd.f32 %v872, %v1064
    %v1066 = vpop.f32.mrb[0].mxu0
    %v1067 = vadd.f32 %v874, %v1066
    %v1068 = vpop.f32.mrb[0].mxu0
    %v1069 = vadd.f32 %v876, %v1068
    %1070 = vmatprep.mubr.bf16.mxu0 0
    %1071 = vmatmul.mubr.bf16.gmra.mrb[0].mxu0 %v488
    %v1072 = vpop.f32.mrb[0].mxu0
    %v1073 = vadd.f32 %v880, %v1072
    %v1074 = vpop.f32.mrb[0].mxu0
    %v1075 = vadd.f32 %v882, %v1074
    %v1076 = vpop.f32.mrb[0].mxu0
    %v1077 = vadd.f32 %v884, %v1076
    %v1078 = vpop.f32.mrb[0].mxu0
    %v1079 = vadd.f32 %v886, %v1078
    %1080 = vmatprep.mubr.bf16.mxu0 0
    %1081 = vmatmul.mubr.bf16.gmra.mrb[0].mxu0 %v491
    %v1082 = vpop.f32.mrb[0].mxu0
    %v1083 = vadd.f32 %v890, %v1082
    %v1084 = vpop.f32.mrb[0].mxu0
    %v1085 = vadd.f32 %v892, %v1084
    %v1086 = vpop.f32.mrb[0].mxu0
    %v1087 = vadd.f32 %v894, %v1086
    %v1088 = vpop.f32.mrb[0].mxu0
    %v1089 = vadd.f32 %v896, %v1088
    %1090 = vmatprep.mubr.bf16.mxu0 0
    %1091 = vmatmul.mubr.bf16.gmra.mrb[0].mxu0 %v494
    %v1092 = vpop.f32.mrb[0].mxu0
    %v1093 = vadd.f32 %v900, %v1092
    %v1094 = vpop.f32.mrb[0].mxu0
    %v1095 = vadd.f32 %v902, %v1094
    %v1096 = vpop.f32.mrb[0].mxu0
    %v1097 = vadd.f32 %v904, %v1096
    %v1098 = vpop.f32.mrb[0].mxu0
    %v1099 = vadd.f32 %v906, %v1098
    %1100 = vmatprep.mubr.bf16.mxu0 0
    %1101 = vmatmul.mubr.bf16.gmra.mrb[0].mxu0 %v497
    %v1102 = vpop.f32.mrb[0].mxu0
    %v1103 = vadd.f32 %v910, %v1102
    %v1104 = vpop.f32.mrb[0].mxu0
    %v1105 = vadd.f32 %v912, %v1104
    %v1106 = vpop.f32.mrb[0].mxu0
    %v1107 = vadd.f32 %v914, %v1106
    %v1108 = vpop.f32.mrb[0].mxu0
    %v1109 = vadd.f32 %v916, %v1108
    %1110 = vmatprep.mubr.bf16.mxu0 0
    %1111 = vmatmul.mubr.bf16.gmra.mrb[0].mxu0 %v500
    %v1112 = vpop.f32.mrb[0].mxu0
    %v1113 = vadd.f32 %v920, %v1112
    %v1114 = vpop.f32.mrb[0].mxu0
    %v1115 = vadd.f32 %v922, %v1114
    %v1116 = vpop.f32.mrb[0].mxu0
    %v1117 = vadd.f32 %v924, %v1116
    %v1118 = vpop.f32.mrb[0].mxu0
    %v1119 = vadd.f32 %v926, %v1118
    %1120 = vmatprep.mubr.bf16.mxu0 0
    %1121 = vmatmul.mubr.bf16.gmra.mrb[0].mxu0 %v503
    %v1122 = vpop.f32.mrb[0].mxu0
    %v1123 = vadd.f32 %v930, %v1122
    %v1124 = vpop.f32.mrb[0].mxu0
    %v1125 = vadd.f32 %v932, %v1124
    %v1126 = vpop.f32.mrb[0].mxu0
    %v1127 = vadd.f32 %v934, %v1126
    %v1128 = vpop.f32.mrb[0].mxu0
    %v1129 = vadd.f32 %v936, %v1128
    %1130 = vmatprep.mubr.bf16.mxu0 0
    %1131 = vmatmul.mubr.bf16.gmra.mrb[0].mxu0 %v506
    %v1132 = vpop.f32.mrb[0].mxu0
    %v1133 = vadd.f32 %v940, %v1132
    %v1134 = vpop.f32.mrb[0].mxu0
    %v1135 = vadd.f32 %v942, %v1134
    %v1136 = vpop.f32.mrb[0].mxu0
    %v1137 = vadd.f32 %v944, %v1136
    %v1138 = vpop.f32.mrb[0].mxu0
    %v1139 = vadd.f32 %v946, %v1138
    %1140 = vmatprep.mubr.bf16.mxu0 0
    %1141 = vmatmul.mubr.bf16.gmra.mrb[0].mxu0 %v509
    %v1142 = vpop.f32.mrb[0].mxu0
    %v1143 = vadd.f32 %v950, %v1142
    %v1144 = vpop.f32.mrb[0].mxu0
    %v1145 = vadd.f32 %v952, %v1144
    %v1146 = vpop.f32.mrb[0].mxu0
    %v1147 = vadd.f32 %v954, %v1146
    %v1148 = vpop.f32.mrb[0].mxu0
    %v1149 = vadd.f32 %v956, %v1148
    %1150 = vmatprep.mubr.bf16.mxu0 0
    %1151 = vmatmul.mubr.bf16.gmra.mrb[0].mxu0 %v512
    %v1152 = vpop.f32.mrb[0].mxu0
    %v1153 = vadd.f32 %v960, %v1152
    %v1154 = vpop.f32.mrb[0].mxu0
    %v1155 = vadd.f32 %v962, %v1154
    %v1156 = vpop.f32.mrb[0].mxu0
    %v1157 = vadd.f32 %v964, %v1156
    %v1158 = vpop.f32.mrb[0].mxu0
    %v1159 = vadd.f32 %v966, %v1158
    %1160 = vmatprep.mubr.bf16.mxu0 0
    %1161 = vmatmul.mubr.bf16.gmra.mrb[0].mxu0 %v515
    %v1162 = vpop.f32.mrb[0].mxu0
    %v1163 = vadd.f32 %v970, %v1162
    %v1164 = vpop.f32.mrb[0].mxu0
    %v1165 = vadd.f32 %v972, %v1164
    %v1166 = vpop.f32.mrb[0].mxu0
    %v1167 = vadd.f32 %v974, %v1166
    %v1168 = vpop.f32.mrb[0].mxu0
    %v1169 = vadd.f32 %v976, %v1168
    %1170 = vmatprep.mubr.bf16.mxu0 0
    %1171 = vmatmul.mubr.bf16.gmra.mrb[0].mxu0 %v518
    %v1172 = vpop.f32.mrb[0].mxu0
    %v1173 = vadd.f32 %v980, %v1172
    %v1174 = vpop.f32.mrb[0].mxu0
    %v1175 = vadd.f32 %v982, %v1174
    %v1176 = vpop.f32.mrb[0].mxu0
    %v1177 = vadd.f32 %v984, %v1176
    %v1178 = vpop.f32.mrb[0].mxu0
    %v1179 = vadd.f32 %v986, %v1178
    %1180 = vmatprep.mubr.bf16.mxu0 0
    %1181 = vmatmul.mubr.bf16.gmra.mrb[0].mxu0 %v521
    %v1182 = vpop.f32.mrb[0].mxu0
    %v1183 = vadd.f32 %v990, %v1182
    %v1184 = vpop.f32.mrb[0].mxu0
    %v1185 = vadd.f32 %v992, %v1184
    %v1186 = vpop.f32.mrb[0].mxu0
    %v1187 = vadd.f32 %v994, %v1186
    %v1188 = vpop.f32.mrb[0].mxu0
    %v1189 = vadd.f32 %v996, %v1188
    %1190 = vmatprep.mubr.bf16.mxu0 0
    %1191 = vmatmul.mubr.bf16.gmra.mrb[0].mxu0 %v524
    %v1192 = vpop.f32.mrb[0].mxu0
    %v1193 = vadd.f32 %v1000, %v1192
    %v1194 = vpop.f32.mrb[0].mxu0
    %v1195 = vadd.f32 %v1002, %v1194
    %v1196 = vpop.f32.mrb[0].mxu0
    %v1197 = vadd.f32 %v1004, %v1196
    %v1198 = vpop.f32.mrb[0].mxu0
    %v1199 = vadd.f32 %v1006, %v1198
    %1200 = vmatprep.mubr.bf16.mxu0 0
    %1201 = vmatmul.mubr.bf16.gmra.mrb[0].mxu0 %v527
    %v1202 = vpop.f32.mrb[0].mxu0
    %v1203 = vadd.f32 %v1010, %v1202
    %v1204 = vpop.f32.mrb[0].mxu0
    %v1205 = vadd.f32 %v1012, %v1204
    %v1206 = vpop.f32.mrb[0].mxu0
    %v1207 = vadd.f32 %v1014, %v1206
    %v1208 = vpop.f32.mrb[0].mxu0
    %v1209 = vadd.f32 %v1016, %v1208
    %1210 = vmatprep.mubr.bf16.mxu0 0
    %1211 = vmatmul.mubr.bf16.gmra.mrb[0].mxu0 %v530
    %v1212 = vpop.f32.mrb[0].mxu0
    %v1213 = vadd.f32 %v1020, %v1212
    %v1214 = vpop.f32.mrb[0].mxu0
    %v1215 = vadd.f32 %v1022, %v1214
    %v1216 = vpop.f32.mrb[0].mxu0
    %v1217 = vadd.f32 %v1024, %v1216
    %v1218 = vpop.f32.mrb[0].mxu0
    %v1219 = vadd.f32 %v1026, %v1218
    %1220 = vdwg.mxu0
    %v1221 = vadd.f32 %v131, %v1063
    %v1222 = vadd.f32 %v132, %v1065
    %v1223 = vadd.f32 %v133, %v1067
    %v1224 = vadd.f32 %v134, %v1069
    %v1225 = vadd.f32 %v135, %v1073
    %v1226 = vadd.f32 %v136, %v1075
    %v1227 = vadd.f32 %v137, %v1077
    %v1228 = vadd.f32 %v138, %v1079
    %v1229 = vadd.f32 %v139, %v1083
    %v1230 = vadd.f32 %v140, %v1085
    %v1231 = vadd.f32 %v141, %v1087
    %v1232 = vadd.f32 %v142, %v1089
    %v1233 = vadd.f32 %v143, %v1093
    %v1234 = vadd.f32 %v144, %v1095
    %v1235 = vadd.f32 %v145, %v1097
    %v1236 = vadd.f32 %v146, %v1099
    %v1237 = vadd.f32 %v147, %v1103
    %v1238 = vadd.f32 %v148, %v1105
    %v1239 = vadd.f32 %v149, %v1107
    %v1240 = vadd.f32 %v150, %v1109
    %v1241 = vadd.f32 %v151, %v1113
    %v1242 = vadd.f32 %v152, %v1115
    %v1243 = vadd.f32 %v153, %v1117
    %v1244 = vadd.f32 %v154, %v1119
    %v1245 = vadd.f32 %v155, %v1123
    %v1246 = vadd.f32 %v156, %v1125
    %v1247 = vadd.f32 %v157, %v1127
    %v1248 = vadd.f32 %v158, %v1129
    %v1249 = vadd.f32 %v159, %v1133
    %v1250 = vadd.f32 %v160, %v1135
    %v1251 = vadd.f32 %v161, %v1137
    %v1252 = vadd.f32 %v162, %v1139
    %v1253 = vadd.f32 %v163, %v1143
    %v1254 = vadd.f32 %v164, %v1145
    %v1255 = vadd.f32 %v165, %v1147
    %v1256 = vadd.f32 %v166, %v1149
    %v1257 = vadd.f32 %v167, %v1153
    %v1258 = vadd.f32 %v168, %v1155
    %v1259 = vadd.f32 %v169, %v1157
    %v1260 = vadd.f32 %v170, %v1159
    %v1261 = vadd.f32 %v171, %v1163
    %v1262 = vadd.f32 %v172, %v1165
    %v1263 = vadd.f32 %v173, %v1167
    %v1264 = vadd.f32 %v174, %v1169
    %v1265 = vadd.f32 %v175, %v1173
    %v1266 = vadd.f32 %v176, %v1175
    %v1267 = vadd.f32 %v177, %v1177
    %v1268 = vadd.f32 %v178, %v1179
    %v1269 = vadd.f32 %v179, %v1183
    %v1270 = vadd.f32 %v180, %v1185
    %v1271 = vadd.f32 %v181, %v1187
    %v1272 = vadd.f32 %v182, %v1189
    %v1273 = vadd.f32 %v183, %v1193
    %v1274 = vadd.f32 %v184, %v1195
    %v1275 = vadd.f32 %v185, %v1197
    %v1276 = vadd.f32 %v186, %v1199
    %v1277 = vadd.f32 %v187, %v1203
    %v1278 = vadd.f32 %v188, %v1205
    %v1279 = vadd.f32 %v189, %v1207
    %v1280 = vadd.f32 %v190, %v1209
    %v1281 = vadd.f32 %v191, %v1213
    %v1282 = vadd.f32 %v192, %v1215
    %v1283 = vadd.f32 %v193, %v1217
    %v1284 = vadd.f32 %v194, %v1219
    %1285 = vst [vmem:[#allocation2] sm:$0xff] %v1221
    %1286 = vst [vmem:[#allocation2 + $0x8] sm:$0xff] %v1222
    %1287 = vst [vmem:[#allocation2 + $0x10] sm:$0xff] %v1223
    %1288 = vst [vmem:[#allocation2 + $0x18] sm:$0xff] %v1224
    %1289 = vst [vmem:[#allocation2 + $0x20] sm:$0xff] %v1225
    %1290 = vst [vmem:[#allocation2 + $0x28] sm:$0xff] %v1226
    %1291 = vst [vmem:[#allocation2 + $0x30] sm:$0xff] %v1227
    %1292 = vst [vmem:[#allocation2 + $0x38] sm:$0xff] %v1228
    %1293 = vst [vmem:[#allocation2 + $0x40] sm:$0xff] %v1229
    %1294 = vst [vmem:[#allocation2 + $0x48] sm:$0xff] %v1230
    %1295 = vst [vmem:[#allocation2 + $0x50] sm:$0xff] %v1231
    %1296 = vst [vmem:[#allocation2 + $0x58] sm:$0xff] %v1232
    %1297 = vst [vmem:[#allocation2 + $0x60] sm:$0xff] %v1233
    %1298 = vst [vmem:[#allocation2 + $0x68] sm:$0xff] %v1234
    %1299 = vst [vmem:[#allocation2 + $0x70] sm:$0xff] %v1235
    %1300 = vst [vmem:[#allocation2 + $0x78] sm:$0xff] %v1236
    %1301 = vst [vmem:[#allocation2 + $0x80] sm:$0xff] %v1237
    %1302 = vst [vmem:[#allocation2 + $0x88] sm:$0xff] %v1238
    %1303 = vst [vmem:[#allocation2 + $0x90] sm:$0xff] %v1239
    %1304 = vst [vmem:[#allocation2 + $0x98] sm:$0xff] %v1240
    %1305 = vst [vmem:[#allocation2 + $0xa0] sm:$0xff] %v1241
    %1306 = vst [vmem:[#allocation2 + $0xa8] sm:$0xff] %v1242
    %1307 = vst [vmem:[#allocation2 + $0xb0] sm:$0xff] %v1243
    %1308 = vst [vmem:[#allocation2 + $0xb8] sm:$0xff] %v1244
    %1309 = vst [vmem:[#allocation2 + $0xc0] sm:$0xff] %v1245
    %1310 = vst [vmem:[#allocation2 + $0xc8] sm:$0xff] %v1246
    %1311 = vst [vmem:[#allocation2 + $0xd0] sm:$0xff] %v1247
    %1312 = vst [vmem:[#allocation2 + $0xd8] sm:$0xff] %v1248
    %1313 = vst [vmem:[#allocation2 + $0xe0] sm:$0xff] %v1249
    %1314 = vst [vmem:[#allocation2 + $0xe8] sm:$0xff] %v1250
    %1315 = vst [vmem:[#allocation2 + $0xf0] sm:$0xff] %v1251
    %1316 = vst [vmem:[#allocation2 + $0xf8] sm:$0xff] %v1252
    %1317 = vst [vmem:[#allocation2 + $0x100] sm:$0xff] %v1253
    %1318 = vst [vmem:[#allocation2 + $0x108] sm:$0xff] %v1254
    %1319 = vst [vmem:[#allocation2 + $0x110] sm:$0xff] %v1255
    %1320 = vst [vmem:[#allocation2 + $0x118] sm:$0xff] %v1256
    %1321 = vst [vmem:[#allocation2 + $0x120] sm:$0xff] %v1257
    %1322 = vst [vmem:[#allocation2 + $0x128] sm:$0xff] %v1258
    %1323 = vst [vmem:[#allocation2 + $0x130] sm:$0xff] %v1259
    %1324 = vst [vmem:[#allocation2 + $0x138] sm:$0xff] %v1260
    %1325 = vst [vmem:[#allocation2 + $0x140] sm:$0xff] %v1261
    %1326 = vst [vmem:[#allocation2 + $0x148] sm:$0xff] %v1262
    %1327 = vst [vmem:[#allocation2 + $0x150] sm:$0xff] %v1263
    %1328 = vst [vmem:[#allocation2 + $0x158] sm:$0xff] %v1264
    %1329 = vst [vmem:[#allocation2 + $0x160] sm:$0xff] %v1265
    %1330 = vst [vmem:[#allocation2 + $0x168] sm:$0xff] %v1266
    %1331 = vst [vmem:[#allocation2 + $0x170] sm:$0xff] %v1267
    %1332 = vst [vmem:[#allocation2 + $0x178] sm:$0xff] %v1268
    %1333 = vst [vmem:[#allocation2 + $0x180] sm:$0xff] %v1269
    %1334 = vst [vmem:[#allocation2 + $0x188] sm:$0xff] %v1270
    %1335 = vst [vmem:[#allocation2 + $0x190] sm:$0xff] %v1271
    %1336 = vst [vmem:[#allocation2 + $0x198] sm:$0xff] %v1272
    %1337 = vst [vmem:[#allocation2 + $0x1a0] sm:$0xff] %v1273
    %1338 = vst [vmem:[#allocation2 + $0x1a8] sm:$0xff] %v1274
    %1339 = vst [vmem:[#allocation2 + $0x1b0] sm:$0xff] %v1275
    %1340 = vst [vmem:[#allocation2 + $0x1b8] sm:$0xff] %v1276
    %1341 = vst [vmem:[#allocation2 + $0x1c0] sm:$0xff] %v1277
    %1342 = vst [vmem:[#allocation2 + $0x1c8] sm:$0xff] %v1278
    %1343 = vst [vmem:[#allocation2 + $0x1d0] sm:$0xff] %v1279
    %1344 = vst [vmem:[#allocation2 + $0x1d8] sm:$0xff] %v1280
    %1345 = vst [vmem:[#allocation2 + $0x1e0] sm:$0xff] %v1281
    %1346 = vst [vmem:[#allocation2 + $0x1e8] sm:$0xff] %v1282
    %1347 = vst [vmem:[#allocation2 + $0x1f0] sm:$0xff] %v1283
    %1348 = vst [vmem:[#allocation2 + $0x1f8] sm:$0xff] %v1284
    // Predicated region
    $region22: #{tpu_custom_call.1} parent=1 // pred_check
      %p1349 = pneg %p63
    $region23: #{tpu_custom_call.1} parent=1 // pred_check_branch
      %1351 = sbr.rel (%p1349) target = $region25
    $region24: #{tpu_custom_call.1} parent=1 // pred_region
      %v1352 = vld [vmem:[#allocation2] sm:$0xff]
      %v1353 = vld [vmem:[#allocation2 + $0x8] sm:$0xff]
      %v1354 = vld [vmem:[#allocation2 + $0x10] sm:$0xff]
      %v1355 = vld [vmem:[#allocation2 + $0x18] sm:$0xff]
      %v1356 = vld [vmem:[#allocation2 + $0x20] sm:$0xff]
      %v1357 = vld [vmem:[#allocation2 + $0x28] sm:$0xff]
      %v1358 = vld [vmem:[#allocation2 + $0x30] sm:$0xff]
      %v1359 = vld [vmem:[#allocation2 + $0x38] sm:$0xff]
      %v1360 = vld [vmem:[#allocation2 + $0x40] sm:$0xff]
      %v1361 = vld [vmem:[#allocation2 + $0x48] sm:$0xff]
      %v1362 = vld [vmem:[#allocation2 + $0x50] sm:$0xff]
      %v1363 = vld [vmem:[#allocation2 + $0x58] sm:$0xff]
      %v1364 = vld [vmem:[#allocation2 + $0x60] sm:$0xff]
      %v1365 = vld [vmem:[#allocation2 + $0x68] sm:$0xff]
      %v1366 = vld [vmem:[#allocation2 + $0x70] sm:$0xff]
      %v1367 = vld [vmem:[#allocation2 + $0x78] sm:$0xff]
      %v1368 = vld [vmem:[#allocation2 + $0x80] sm:$0xff]
      %v1369 = vld [vmem:[#allocation2 + $0x88] sm:$0xff]
      %v1370 = vld [vmem:[#allocation2 + $0x90] sm:$0xff]
      %v1371 = vld [vmem:[#allocation2 + $0x98] sm:$0xff]
      %v1372 = vld [vmem:[#allocation2 + $0xa0] sm:$0xff]
      %v1373 = vld [vmem:[#allocation2 + $0xa8] sm:$0xff]
      %v1374 = vld [vmem:[#allocation2 + $0xb0] sm:$0xff]
      %v1375 = vld [vmem:[#allocation2 + $0xb8] sm:$0xff]
      %v1376 = vld [vmem:[#allocation2 + $0xc0] sm:$0xff]
      %v1377 = vld [vmem:[#allocation2 + $0xc8] sm:$0xff]
      %v1378 = vld [vmem:[#allocation2 + $0xd0] sm:$0xff]
      %v1379 = vld [vmem:[#allocation2 + $0xd8] sm:$0xff]
      %v1380 = vld [vmem:[#allocation2 + $0xe0] sm:$0xff]
      %v1381 = vld [vmem:[#allocation2 + $0xe8] sm:$0xff]
      %v1382 = vld [vmem:[#allocation2 + $0xf0] sm:$0xff]
      %v1383 = vld [vmem:[#allocation2 + $0xf8] sm:$0xff]
      %v1384 = vld [vmem:[#allocation2 + $0x100] sm:$0xff]
      %v1385 = vld [vmem:[#allocation2 + $0x108] sm:$0xff]
      %v1386 = vld [vmem:[#allocation2 + $0x110] sm:$0xff]
      %v1387 = vld [vmem:[#allocation2 + $0x118] sm:$0xff]
      %v1388 = vld [vmem:[#allocation2 + $0x120] sm:$0xff]
      %v1389 = vld [vmem:[#allocation2 + $0x128] sm:$0xff]
      %v1390 = vld [vmem:[#allocation2 + $0x130] sm:$0xff]
      %v1391 = vld [vmem:[#allocation2 + $0x138] sm:$0xff]
      %v1392 = vld [vmem:[#allocation2 + $0x140] sm:$0xff]
      %v1393 = vld [vmem:[#allocation2 + $0x148] sm:$0xff]
      %v1394 = vld [vmem:[#allocation2 + $0x150] sm:$0xff]
      %v1395 = vld [vmem:[#allocation2 + $0x158] sm:$0xff]
      %v1396 = vld [vmem:[#allocation2 + $0x160] sm:$0xff]
      %v1397 = vld [vmem:[#allocation2 + $0x168] sm:$0xff]
      %v1398 = vld [vmem:[#allocation2 + $0x170] sm:$0xff]
      %v1399 = vld [vmem:[#allocation2 + $0x178] sm:$0xff]
      %v1400 = vld [vmem:[#allocation2 + $0x180] sm:$0xff]
      %v1401 = vld [vmem:[#allocation2 + $0x188] sm:$0xff]
      %v1402 = vld [vmem:[#allocation2 + $0x190] sm:$0xff]
      %v1403 = vld [vmem:[#allocation2 + $0x198] sm:$0xff]
      %v1404 = vld [vmem:[#allocation2 + $0x1a0] sm:$0xff]
      %v1405 = vld [vmem:[#allocation2 + $0x1a8] sm:$0xff]
      %v1406 = vld [vmem:[#allocation2 + $0x1b0] sm:$0xff]
      %v1407 = vld [vmem:[#allocation2 + $0x1b8] sm:$0xff]
      %v1408 = vld [vmem:[#allocation2 + $0x1c0] sm:$0xff]
      %v1409 = vld [vmem:[#allocation2 + $0x1c8] sm:$0xff]
      %v1410 = vld [vmem:[#allocation2 + $0x1d0] sm:$0xff]
      %v1411 = vld [vmem:[#allocation2 + $0x1d8] sm:$0xff]
      %v1412 = vld [vmem:[#allocation2 + $0x1e0] sm:$0xff]
      %v1413 = vld [vmem:[#allocation2 + $0x1e8] sm:$0xff]
      %v1414 = vld [vmem:[#allocation2 + $0x1f0] sm:$0xff]
      %v1415 = vld [vmem:[#allocation2 + $0x1f8] sm:$0xff]
      %1416 = vst [vmem:[#allocation11] sm:$0xff] %v1352
      %1417 = vst [vmem:[#allocation11 + $0x8] sm:$0xff] %v1353
      %1418 = vst [vmem:[#allocation11 + $0x10] sm:$0xff] %v1354
      %1419 = vst [vmem:[#allocation11 + $0x18] sm:$0xff] %v1355
      %1420 = vst [vmem:[#allocation11 + $0x20] sm:$0xff] %v1356
      %1421 = vst [vmem:[#allocation11 + $0x28] sm:$0xff] %v1357
      %1422 = vst [vmem:[#allocation11 + $0x30] sm:$0xff] %v1358
      %1423 = vst [vmem:[#allocation11 + $0x38] sm:$0xff] %v1359
      %1424 = vst [vmem:[#allocation11 + $0x40] sm:$0xff] %v1360
      %1425 = vst [vmem:[#allocation11 + $0x48] sm:$0xff] %v1361
      %1426 = vst [vmem:[#allocation11 + $0x50] sm:$0xff] %v1362
      %1427 = vst [vmem:[#allocation11 + $0x58] sm:$0xff] %v1363
      %1428 = vst [vmem:[#allocation11 + $0x60] sm:$0xff] %v1364
      %1429 = vst [vmem:[#allocation11 + $0x68] sm:$0xff] %v1365
      %1430 = vst [vmem:[#allocation11 + $0x70] sm:$0xff] %v1366
      %1431 = vst [vmem:[#allocation11 + $0x78] sm:$0xff] %v1367
      %1432 = vst [vmem:[#allocation11 + $0x80] sm:$0xff] %v1368
      %1433 = vst [vmem:[#allocation11 + $0x88] sm:$0xff] %v1369
      %1434 = vst [vmem:[#allocation11 + $0x90] sm:$0xff] %v1370
      %1435 = vst [vmem:[#allocation11 + $0x98] sm:$0xff] %v1371
      %1436 = vst [vmem:[#allocation11 + $0xa0] sm:$0xff] %v1372
      %1437 = vst [vmem:[#allocation11 + $0xa8] sm:$0xff] %v1373
      %1438 = vst [vmem:[#allocation11 + $0xb0] sm:$0xff] %v1374
      %1439 = vst [vmem:[#allocation11 + $0xb8] sm:$0xff] %v1375
      %1440 = vst [vmem:[#allocation11 + $0xc0] sm:$0xff] %v1376
      %1441 = vst [vmem:[#allocation11 + $0xc8] sm:$0xff] %v1377
      %1442 = vst [vmem:[#allocation11 + $0xd0] sm:$0xff] %v1378
      %1443 = vst [vmem:[#allocation11 + $0xd8] sm:$0xff] %v1379
      %1444 = vst [vmem:[#allocation11 + $0xe0] sm:$0xff] %v1380
      %1445 = vst [vmem:[#allocation11 + $0xe8] sm:$0xff] %v1381
      %1446 = vst [vmem:[#allocation11 + $0xf0] sm:$0xff] %v1382
      %1447 = vst [vmem:[#allocation11 + $0xf8] sm:$0xff] %v1383
      %1448 = vst [vmem:[#allocation11 + $0x100] sm:$0xff] %v1384
      %1449 = vst [vmem:[#allocation11 + $0x108] sm:$0xff] %v1385
      %1450 = vst [vmem:[#allocation11 + $0x110] sm:$0xff] %v1386
      %1451 = vst [vmem:[#allocation11 + $0x118] sm:$0xff] %v1387
      %1452 = vst [vmem:[#allocation11 + $0x120] sm:$0xff] %v1388
      %1453 = vst [vmem:[#allocation11 + $0x128] sm:$0xff] %v1389
      %1454 = vst [vmem:[#allocation11 + $0x130] sm:$0xff] %v1390
      %1455 = vst [vmem:[#allocation11 + $0x138] sm:$0xff] %v1391
      %1456 = vst [vmem:[#allocation11 + $0x140] sm:$0xff] %v1392
      %1457 = vst [vmem:[#allocation11 + $0x148] sm:$0xff] %v1393
      %1458 = vst [vmem:[#allocation11 + $0x150] sm:$0xff] %v1394
      %1459 = vst [vmem:[#allocation11 + $0x158] sm:$0xff] %v1395
      %1460 = vst [vmem:[#allocation11 + $0x160] sm:$0xff] %v1396
      %1461 = vst [vmem:[#allocation11 + $0x168] sm:$0xff] %v1397
      %1462 = vst [vmem:[#allocation11 + $0x170] sm:$0xff] %v1398
      %1463 = vst [vmem:[#allocation11 + $0x178] sm:$0xff] %v1399
      %1464 = vst [vmem:[#allocation11 + $0x180] sm:$0xff] %v1400
      %1465 = vst [vmem:[#allocation11 + $0x188] sm:$0xff] %v1401
      %1466 = vst [vmem:[#allocation11 + $0x190] sm:$0xff] %v1402
      %1467 = vst [vmem:[#allocation11 + $0x198] sm:$0xff] %v1403
      %1468 = vst [vmem:[#allocation11 + $0x1a0] sm:$0xff] %v1404
      %1469 = vst [vmem:[#allocation11 + $0x1a8] sm:$0xff] %v1405
      %1470 = vst [vmem:[#allocation11 + $0x1b0] sm:$0xff] %v1406
      %1471 = vst [vmem:[#allocation11 + $0x1b8] sm:$0xff] %v1407
      %1472 = vst [vmem:[#allocation11 + $0x1c0] sm:$0xff] %v1408
      %1473 = vst [vmem:[#allocation11 + $0x1c8] sm:$0xff] %v1409
      %1474 = vst [vmem:[#allocation11 + $0x1d0] sm:$0xff] %v1410
      %1475 = vst [vmem:[#allocation11 + $0x1d8] sm:$0xff] %v1411
      %1476 = vst [vmem:[#allocation11 + $0x1e0] sm:$0xff] %v1412
      %1477 = vst [vmem:[#allocation11 + $0x1e8] sm:$0xff] %v1413
      %1478 = vst [vmem:[#allocation11 + $0x1f0] sm:$0xff] %v1414
      %1479 = vst [vmem:[#allocation11 + $0x1f8] sm:$0xff] %v1415
    $region25: #{tpu_custom_call.1} parent=1 // pred_fallthru
      _
    // Predicated region
    $region26: #{tpu_custom_call.1} parent=1 // pred_check
      _
    $region27: #{tpu_custom_call.1} parent=1 // pred_check_branch
      %1481 = sbr.rel (0) target = $region29
    $region28: #{tpu_custom_call.1} parent=1 // pred_region
      %s1482 = sld [smem:[#allocation4]]
      %s1483 = sld [smem:[#allocation5]]
      %s1484 = smul.u32 32, %s1482
      %s1485 = smul.u32 2, %s1483
      %s1487 = ssub.s32 8192, 8192
      %1488 = vsyncadd [#allocation8], %s1487
      %s1489 = smul.addr %s1484, 2
      %s1490 = sadd.s32 %s1485, %s1489
      %s1491 = smul.addr %s1490, 128
      %s1492 = scalar_lea.hbm %s4, %s1491
      %s1493 = sshll.u32 [#allocation11], 4
      %s1494 = int_to_ptr.vmem [resolvable:$true] %s1493
      %1499 = dma.vmem_to_hbm [thread:$0]  %s1494, 8192, %s1492, [#allocation8], 256, 256, 16
    $region29: #{tpu_custom_call.1} parent=1 // pred_fallthru
      _
    // Predicated region
    $region30: #{tpu_custom_call.1} parent=1 // pred_check
      _
    $region31: #{tpu_custom_call.1} parent=1 // pred_check_branch
      %1501 = sbr.rel (0) target = $region33
    $region32: #{tpu_custom_call.1} parent=1 // pred_region
      %1502 = dma.done [#allocation8], 8192
    $region33: #{tpu_custom_call.1} parent=1 // pred_fallthru
      _
    %1503 = vsyncpa [#allocation7], 1
    %1504 = vsyncpa [#allocation10], 1
    %1505 = vsyncpa [#allocation8], 1

</llo_original>
